<compile_context>
chip_gen: v6e
topology: v6e:2x2x1
jax: 0.10.0
libtpu: 0.0.40
codegen_flags: <defaults>
</compile_context>

<pallas_src>
import functools

import jax
import jax.numpy as jnp
from jax.experimental import pallas as pl
from jax.experimental.pallas import tpu as pltpu


# Operand dtype fed to the MXU. Set to jnp.bfloat16 on v6e/v7x for ~2x MXU
# throughput and half the weight VMEM/DMA footprint (loosen the test tolerance
# to ~1e-2 if you do); jnp.float32 keeps the tight 1e-4 reference check below.
# Gate math, cell state and accumulation stay f32 either way (v5e has no bf16
# VPU/EUP).
MXU_DTYPE = jnp.float32


# ----------------------------- Pallas kernel --------------------------------

def _lstm_direction_kernel(
    len_ref,      # (B, 1) int32   per-example sequence lengths
    x_ref,        # (1, T*B, E)    embedded sequence, rows in processing order
    wih_ref,      # (1, E, 4H)     input->gates weights for this direction
    b_ref,        # (1, 1, 4H)     combined gate bias (b_ih + b_hh)
    whh_ref,      # (1, H, 4H)     hidden->gates weights
    fcw_ref,      # (1, H, O)      this direction's half of fc.weight^T
    out_ref,      # (1, B, O)      partial FC output for this direction
    xg_ref,       # VMEM scratch (T*B, 4H) f32: hoisted input projections
    *, seq_len: int, batch: int, hidden_dim: int, compute_dtype,
):
  T, B, H = seq_len, batch, hidden_dim
  d = pl.program_id(0)        # 0 = forward direction, 1 = backward direction

  # Lengths loaded exactly once, before the recurrence (no per-step VMEM dep).
  lens = len_ref[...]                                         # (B, 1) int32

  # Hoisted input projection: one large (T*B, E) @ (E, 4H) matmul over the
  # whole sequence (well shaped for the MXU) instead of T tiny matmuls on the
  # serial critical path. Bias folded in once.
  xg_ref[...] = (
      jnp.dot(x_ref[0], wih_ref[0], preferred_element_type=jnp.float32)
      + b_ref[0])

  # Recurrence. T is small and static -> unroll at trace time; every VMEM
  # slice below is static. Only the (B,H)@(H,4H) matmul remains per step.
  h = jnp.zeros((B, H), jnp.float32)
  c = jnp.zeros((B, H), jnp.float32)
  for s in range(T):
    # x rows are already in processing order; the *original* time index is
    # s for the forward direction and T-1-s for the backward direction.
    t = jnp.where(d == 0, s, T - 1 - s)
    gates = (xg_ref[pl.ds(s * B, B), :]
             + jnp.dot(h.astype(compute_dtype), whh_ref[0],
                       preferred_element_type=jnp.float32))
    # PyTorch gate layout along 4H: [i | f | g | o]  (H=128 -> lane aligned)
    i = jax.nn.sigmoid(gates[:, 0 * H:1 * H])
    f = jax.nn.sigmoid(gates[:, 1 * H:2 * H])
    g = jnp.tanh(gates[:, 2 * H:3 * H])
    o = jax.nn.sigmoid(gates[:, 3 * H:4 * H])
    c_new = f * c + i * g
    h_new = o * jnp.tanh(c_new)
    # packed-sequence semantics: update only while t < length[b]
    #   forward : state freezes at t = len-1      -> last valid hidden
    #   backward: state stays 0 until t = len-1   -> hidden at t = 0
    mask = t < lens                                           # (B, 1) bool
    h = jnp.where(mask, h_new, h)
    c = jnp.where(mask, c_new, c)

  # Partial classifier head for this direction: (B, H) @ (H, O).
  out_ref[0] = jnp.dot(h.astype(compute_dtype), fcw_ref[0],
                       preferred_element_type=jnp.float32)


def rnn_classifier_forward(x_ids, lengths, params):
  """x_ids: (B, T) int32, lengths: (B,) int32. Returns logits (B, O) f32."""
  B, T = x_ids.shape
  E = params["embedding"].shape[1]
  H = params["w_ih_f"].shape[0] // 4
  O = params["fc_w"].shape[0]

  # ---- glue (plain JAX): embedding gather; dropout is eval-mode identity ----
  emb = jnp.take(params["embedding"], x_ids, axis=0)          # (B, T, E)
  emb = jnp.transpose(emb, (1, 0, 2)).astype(jnp.float32)     # (T, B, E)

  # Pad the contraction dim E up to a multiple of 8 (avoids a ragged MXU K
  # edge); zero columns in x and zero rows in W_ih keep the math identical.
  E_pad = -(-E // 8) * 8
  if E_pad != E:
    emb = jnp.pad(emb, ((0, 0), (0, 0), (0, E_pad - E)))

  # Per-direction sequences in processing order (bwd gets the time-reversed
  # copy) so all in-kernel scratch indexing is static.
  x_stack = jnp.stack([emb.reshape(T * B, E_pad),
                       emb[::-1].reshape(T * B, E_pad)]).astype(MXU_DTYPE)

  def direction(sfx):
    w_ih = params["w_ih" + sfx].T                             # (E, 4H)
    if E_pad != E:
      w_ih = jnp.pad(w_ih, ((0, E_pad - E), (0, 0)))
    bias = (params["b_ih" + sfx] + params["b_hh" + sfx]).reshape(1, 4 * H)
    return w_ih, bias, params["w_hh" + sfx].T                 # (H, 4H)

  wif, bf, whf = direction("_f")
  wib, bb, whb = direction("_b")
  fcw_t = params["fc_w"].T                                    # (2H, O)

  w_ih = jnp.stack([wif, wib]).astype(MXU_DTYPE)              # (2, E_pad, 4H)
  bias = jnp.stack([bf, bb]).astype(jnp.float32)              # (2, 1, 4H)
  w_hh = jnp.stack([whf, whb]).astype(MXU_DTYPE)              # (2, H, 4H)
  fc_w = jnp.stack([fcw_t[:H], fcw_t[H:]]).astype(MXU_DTYPE)  # (2, H, O)
  lens = lengths.astype(jnp.int32).reshape(B, 1)

  kernel = functools.partial(_lstm_direction_kernel, seq_len=T, batch=B,
                             hidden_dim=H, compute_dtype=MXU_DTYPE)

  shared = lambda shape: pl.BlockSpec(shape, lambda d: (0,) * len(shape))
  per_dir = lambda shape: pl.BlockSpec((1,) + shape,
                                       lambda d: (d,) + (0,) * len(shape))

  partials = pl.pallas_call(
      kernel,
      out_shape=jax.ShapeDtypeStruct((2, B, O), jnp.float32),
      grid_spec=pltpu.PrefetchScalarGridSpec(
          num_scalar_prefetch=0,
          grid=(2,),                                 # the two LSTM directions
          in_specs=[
              shared((B, 1)),                        # lengths
              per_dir((T * B, E_pad)),               # embedded sequence
              per_dir((E_pad, 4 * H)),               # W_ih
              per_dir((1, 4 * H)),                   # b_ih + b_hh
              per_dir((H, 4 * H)),                   # W_hh
              per_dir((H, O)),                       # half of fc.weight^T
          ],
          out_specs=per_dir((B, O)),
          scratch_shapes=[pltpu.VMEM((T * B, 4 * H), jnp.float32)],
      ),
      compiler_params=pltpu.CompilerParams(
          dimension_semantics=("parallel",)),        # fwd/bwd on 2 v7x cores
  )(lens, x_stack, w_ih, bias, w_hh, fc_w)

  # Tiny epilogue: logits = h_fwd @ Wf + h_bwd @ Wb + fc_b.
  return partials[0] + partials[1] + params["fc_b"][None, :]


# ------------------------ pure-JAX reference (check) -------------------------

def _reference_forward(x_ids, lengths, params):
  B, T = x_ids.shape
  H = params["w_ih_f"].shape[0] // 4
  emb = jnp.take(params["embedding"], x_ids, axis=0)   # (B, T, E)

  def cell(x, h, c, w_ih, w_hh, b_ih, b_hh):
    g = x @ w_ih.T + h @ w_hh.T + b_ih + b_hh
    i, f, gg, o = jnp.split(g, 4, axis=-1)
    c_new = jax.nn.sigmoid(f) * c + jax.nn.sigmoid(i) * jnp.tanh(gg)
    h_new = jax.nn.sigmoid(o) * jnp.tanh(c_new)
    return h_new, c_new

  def run(direction):
    h = jnp.zeros((B, H)); c = jnp.zeros((B, H))
    order = range(T) if direction == "f" else range(T - 1, -1, -1)
    sfx = "_f" if direction == "f" else "_b"
    for t in order:
      hn, cn = cell(emb[:, t], h, c, params["w_ih" + sfx], params["w_hh" + sfx],
                    params["b_ih" + sfx], params["b_hh" + sfx])
      m = (t < lengths)[:, None]
      h = jnp.where(m, hn, h); c = jnp.where(m, cn, c)
    return h

  hcat = jnp.concatenate([run("f"), run("b")], axis=1)
  return hcat @ params["fc_w"].T + params["fc_b"]


# --------------------------------- main --------------------------------------

def _init_params(key, vocab_size, E, H, O):
  ks = jax.random.split(key, 12)
  s = 1.0 / jnp.sqrt(H)
  u = lambda k, shape: jax.random.uniform(k, shape, jnp.float32, -s, s)
  emb = jax.random.normal(ks[0], (vocab_size, E), jnp.float32)
  emb = emb.at[0].set(0.0)  # padding_idx=0
  return {
      "embedding": emb,
      "w_ih_f": u(ks[1], (4 * H, E)), "w_hh_f": u(ks[2], (4 * H, H)),
      "b_ih_f": u(ks[3], (4 * H,)),   "b_hh_f": u(ks[4], (4 * H,)),
      "w_ih_b": u(ks[5], (4 * H, E)), "w_hh_b": u(ks[6], (4 * H, H)),
      "b_ih_b": u(ks[7], (4 * H,)),   "b_hh_b": u(ks[8], (4 * H,)),
      "fc_w": u(ks[9], (O, 2 * H)),   "fc_b": u(ks[10], (O,)),
  }


if __name__ == "__main__":
  B, T = 2, 8
  vocab_size, E, H, O = 30, 50, 128, 5

  key = jax.random.PRNGKey(0)
  kp, kx = jax.random.split(key)
  params = _init_params(kp, vocab_size, E, H, O)

  lengths = jnp.array([8, 5], dtype=jnp.int32)
  x_ids = jax.random.randint(kx, (B, T), 1, vocab_size, dtype=jnp.int32)
  # zero out padded positions (padding_idx = 0), like real padded batches
  pos = jnp.arange(T)[None, :]
  x_ids = jnp.where(pos < lengths[:, None], x_ids, 0)

  out = rnn_classifier_forward(x_ids, lengths, params)
  out = jax.block_until_ready(out)

  ref = _reference_forward(x_ids, lengths, params)
  assert out.shape == (B, O)
  assert jnp.allclose(out, ref, atol=1e-4, rtol=1e-4), (out, ref)

  # TODO(synk): dropout (p=0.3) is a no-op here (inference/eval semantics).
  print("KERNEL_OK")
</pallas_src>

<mosaic_0001>
module attributes {stable_mosaic.version = 11 : i64} {
  func.func @_lstm_direction_kernel(%arg0: i32, %arg1: memref<2x1xi32, #tpu.memory_space<vmem>>, %arg2: memref<1x16x56xf32, #tpu.memory_space<vmem>>, %arg3: memref<1x56x512xf32, #tpu.memory_space<vmem>>, %arg4: memref<1x1x512xf32, #tpu.memory_space<vmem>>, %arg5: memref<1x128x512xf32, #tpu.memory_space<vmem>>, %arg6: memref<1x128x5xf32, #tpu.memory_space<vmem>>, %arg7: memref<1x2x5xf32, #tpu.memory_space<vmem>>, %arg8: memref<16x512xf32, #tpu.memory_space<vmem>>) attributes {dimension_semantics = [#tpu.dimension_semantics<parallel>], iteration_bounds = array<i64: 2>, scalar_prefetch = 0 : i64, scratch_operands = 1 : i64, tpu.core_type = #tpu.core_type<tc>, window_params = [{pipeline_mode = #tpu.pipeline_mode<synchronous>, transform_indices = @transform_0, window_bounds = array<i64: 2, 1>}, {transform_indices = @transform_1, window_bounds = array<i64: 1, 16, 56>}, {transform_indices = @transform_2, window_bounds = array<i64: 1, 56, 512>}, {transform_indices = @transform_3, window_bounds = array<i64: 1, 1, 512>}, {transform_indices = @transform_4, window_bounds = array<i64: 1, 128, 512>}, {transform_indices = @transform_5, window_bounds = array<i64: 1, 128, 5>}, {transform_indices = @transform_6, window_bounds = array<i64: 1, 2, 5>}]} {
    %c0 = arith.constant 0 : index
    %c0_0 = arith.constant 0 : index
    %0 = vector.load %arg1[%c0, %c0_0] : memref<2x1xi32, #tpu.memory_space<vmem>>, vector<2x1xi32>
    %c0_1 = arith.constant 0 : index
    %c0_2 = arith.constant 0 : index
    %c0_3 = arith.constant 0 : index
    %1 = vector.load %arg2[%c0_1, %c0_2, %c0_3] : memref<1x16x56xf32, #tpu.memory_space<vmem>>, vector<1x16x56xf32>
    %2 = vector.shape_cast %1 : vector<1x16x56xf32> to vector<16x56xf32>
    %c0_4 = arith.constant 0 : index
    %c0_5 = arith.constant 0 : index
    %c0_6 = arith.constant 0 : index
    %3 = vector.load %arg3[%c0_4, %c0_5, %c0_6] : memref<1x56x512xf32, #tpu.memory_space<vmem>>, vector<1x56x512xf32>
    %4 = vector.shape_cast %3 : vector<1x56x512xf32> to vector<56x512xf32>
    %cst = arith.constant dense<0.000000e+00> : vector<16x512xf32>
    %5 = tpu.matmul %2, %4, %cst {dimension_numbers = #tpu.dot_dimension_numbers<[1], [0], [0], [1], [0, 0, 1, 1], [], []>} : vector<16x56xf32>, vector<56x512xf32>, vector<16x512xf32> -> vector<16x512xf32>
    %c0_7 = arith.constant 0 : index
    %c0_8 = arith.constant 0 : index
    %c0_9 = arith.constant 0 : index
    %6 = vector.load %arg4[%c0_7, %c0_8, %c0_9] : memref<1x1x512xf32, #tpu.memory_space<vmem>>, vector<1x1x512xf32>
    %7 = vector.shape_cast %6 : vector<1x1x512xf32> to vector<1x512xf32>
    %8 = vector.broadcast %7 : vector<1x512xf32> to vector<16x512xf32>
    %9 = arith.addf %5, %8 : vector<16x512xf32>
    %c0_10 = arith.constant 0 : index
    %c0_11 = arith.constant 0 : index
    %10 = vector.load %arg8[%c0_10, %c0_11] : memref<16x512xf32, #tpu.memory_space<vmem>>, vector<16x512xf32>
    tpu.vector_store %arg8[%c0_10, %c0_11], %9 {strides = array<i32>} : memref<16x512xf32, #tpu.memory_space<vmem>>, vector<16x512xf32>,
    %cst_12 = arith.constant 0.000000e+00 : f32
    %11 = vector.broadcast %cst_12 : f32 to vector<2x128xf32>
    %cst_13 = arith.constant 0.000000e+00 : f32
    %12 = vector.broadcast %cst_13 : f32 to vector<2x128xf32>
    %c0_i32 = arith.constant 0 : i32
    %13 = arith.cmpi eq, %arg0, %c0_i32 : i32
    %c0_i32_14 = arith.constant 0 : i32
    %c7_i32 = arith.constant 7 : i32
    %14 = arith.select %13, %c0_i32_14, %c7_i32 : i32
    %c0_15 = arith.constant 0 : index
    %c0_16 = arith.constant 0 : index
    %15 = vector.load %arg8[%c0_15, %c0_16] : memref<16x512xf32, #tpu.memory_space<vmem>>, vector<2x512xf32>
    %c0_17 = arith.constant 0 : index
    %c0_18 = arith.constant 0 : index
    %c0_19 = arith.constant 0 : index
    %16 = vector.load %arg5[%c0_17, %c0_18, %c0_19] : memref<1x128x512xf32, #tpu.memory_space<vmem>>, vector<1x128x512xf32>
    %17 = vector.shape_cast %16 : vector<1x128x512xf32> to vector<128x512xf32>
    %cst_20 = arith.constant dense<0.000000e+00> : vector<2x512xf32>
    %18 = tpu.matmul %11, %17, %cst_20 {dimension_numbers = #tpu.dot_dimension_numbers<[1], [0], [0], [1], [0, 0, 1, 1], [], []>} : vector<2x128xf32>, vector<128x512xf32>, vector<2x512xf32> -> vector<2x512xf32>
    %19 = arith.addf %15, %18 : vector<2x512xf32>
    %20 = vector.extract_strided_slice %19 {offsets = [0, 0], sizes = [2, 128], strides = [1, 1]} : vector<2x512xf32> to vector<2x128xf32>
    %21 = arith.negf %20 : vector<2x128xf32>
    %22 = math.exp %21 : vector<2x128xf32>
    %cst_21 = arith.constant 1.000000e+00 : f32
    %23 = vector.broadcast %cst_21 : f32 to vector<2x128xf32>
    %24 = arith.addf %23, %22 : vector<2x128xf32>
    %25 = arith.divf %23, %24 : vector<2x128xf32>
    %26 = vector.extract_strided_slice %19 {offsets = [0, 128], sizes = [2, 128], strides = [1, 1]} : vector<2x512xf32> to vector<2x128xf32>
    %27 = arith.negf %26 : vector<2x128xf32>
    %28 = math.exp %27 : vector<2x128xf32>
    %cst_22 = arith.constant 1.000000e+00 : f32
    %29 = vector.broadcast %cst_22 : f32 to vector<2x128xf32>
    %30 = arith.addf %29, %28 : vector<2x128xf32>
    %31 = arith.divf %29, %30 : vector<2x128xf32>
    %32 = vector.extract_strided_slice %19 {offsets = [0, 256], sizes = [2, 128], strides = [1, 1]} : vector<2x512xf32> to vector<2x128xf32>
    %33 = math.tanh %32 : vector<2x128xf32>
    %34 = vector.extract_strided_slice %19 {offsets = [0, 384], sizes = [2, 128], strides = [1, 1]} : vector<2x512xf32> to vector<2x128xf32>
    %35 = arith.negf %34 : vector<2x128xf32>
    %36 = math.exp %35 : vector<2x128xf32>
    %cst_23 = arith.constant 1.000000e+00 : f32
    %37 = vector.broadcast %cst_23 : f32 to vector<2x128xf32>
    %38 = arith.addf %37, %36 : vector<2x128xf32>
    %39 = arith.divf %37, %38 : vector<2x128xf32>
    %40 = arith.mulf %31, %12 : vector<2x128xf32>
    %41 = arith.mulf %25, %33 : vector<2x128xf32>
    %42 = arith.addf %40, %41 : vector<2x128xf32>
    %43 = math.tanh %42 : vector<2x128xf32>
    %44 = arith.mulf %39, %43 : vector<2x128xf32>
    %45 = vector.broadcast %14 : i32 to vector<2x1xi32>
    %46 = arith.cmpi slt, %45, %0 : vector<2x1xi32>
    %47 = vector.shape_cast %46 : vector<2x1xi1> to vector<2x1xi1>
    %48 = vector.broadcast %47 : vector<2x1xi1> to vector<2x128xi1>
    %49 = arith.select %48, %44, %11 : vector<2x128xi1>, vector<2x128xf32>
    %50 = vector.shape_cast %46 : vector<2x1xi1> to vector<2x1xi1>
    %51 = vector.broadcast %50 : vector<2x1xi1> to vector<2x128xi1>
    %52 = arith.select %51, %42, %12 : vector<2x128xi1>, vector<2x128xf32>
    %c0_i32_24 = arith.constant 0 : i32
    %53 = arith.cmpi eq, %arg0, %c0_i32_24 : i32
    %c1_i32 = arith.constant 1 : i32
    %c6_i32 = arith.constant 6 : i32
    %54 = arith.select %53, %c1_i32, %c6_i32 : i32
    %c2 = arith.constant 2 : index
    %c0_25 = arith.constant 0 : index
    %55 = vector.load %arg8[%c2, %c0_25] : memref<16x512xf32, #tpu.memory_space<vmem>>, vector<2x512xf32>
    %c0_26 = arith.constant 0 : index
    %c0_27 = arith.constant 0 : index
    %c0_28 = arith.constant 0 : index
    %56 = vector.load %arg5[%c0_26, %c0_27, %c0_28] : memref<1x128x512xf32, #tpu.memory_space<vmem>>, vector<1x128x512xf32>
    %57 = vector.shape_cast %56 : vector<1x128x512xf32> to vector<128x512xf32>
    %cst_29 = arith.constant dense<0.000000e+00> : vector<2x512xf32>
    %58 = tpu.matmul %49, %57, %cst_29 {dimension_numbers = #tpu.dot_dimension_numbers<[1], [0], [0], [1], [0, 0, 1, 1], [], []>} : vector<2x128xf32>, vector<128x512xf32>, vector<2x512xf32> -> vector<2x512xf32>
    %59 = arith.addf %55, %58 : vector<2x512xf32>
    %60 = vector.extract_strided_slice %59 {offsets = [0, 0], sizes = [2, 128], strides = [1, 1]} : vector<2x512xf32> to vector<2x128xf32>
    %61 = arith.negf %60 : vector<2x128xf32>
    %62 = math.exp %61 : vector<2x128xf32>
    %cst_30 = arith.constant 1.000000e+00 : f32
    %63 = vector.broadcast %cst_30 : f32 to vector<2x128xf32>
    %64 = arith.addf %63, %62 : vector<2x128xf32>
    %65 = arith.divf %63, %64 : vector<2x128xf32>
    %66 = vector.extract_strided_slice %59 {offsets = [0, 128], sizes = [2, 128], strides = [1, 1]} : vector<2x512xf32> to vector<2x128xf32>
    %67 = arith.negf %66 : vector<2x128xf32>
    %68 = math.exp %67 : vector<2x128xf32>
    %cst_31 = arith.constant 1.000000e+00 : f32
    %69 = vector.broadcast %cst_31 : f32 to vector<2x128xf32>
    %70 = arith.addf %69, %68 : vector<2x128xf32>
    %71 = arith.divf %69, %70 : vector<2x128xf32>
    %72 = vector.extract_strided_slice %59 {offsets = [0, 256], sizes = [2, 128], strides = [1, 1]} : vector<2x512xf32> to vector<2x128xf32>
    %73 = math.tanh %72 : vector<2x128xf32>
    %74 = vector.extract_strided_slice %59 {offsets = [0, 384], sizes = [2, 128], strides = [1, 1]} : vector<2x512xf32> to vector<2x128xf32>
    %75 = arith.negf %74 : vector<2x128xf32>
    %76 = math.exp %75 : vector<2x128xf32>
    %cst_32 = arith.constant 1.000000e+00 : f32
    %77 = vector.broadcast %cst_32 : f32 to vector<2x128xf32>
    %78 = arith.addf %77, %76 : vector<2x128xf32>
    %79 = arith.divf %77, %78 : vector<2x128xf32>
    %80 = arith.mulf %71, %52 : vector<2x128xf32>
    %81 = arith.mulf %65, %73 : vector<2x128xf32>
    %82 = arith.addf %80, %81 : vector<2x128xf32>
    %83 = math.tanh %82 : vector<2x128xf32>
    %84 = arith.mulf %79, %83 : vector<2x128xf32>
    %85 = vector.broadcast %54 : i32 to vector<2x1xi32>
    %86 = arith.cmpi slt, %85, %0 : vector<2x1xi32>
    %87 = vector.shape_cast %86 : vector<2x1xi1> to vector<2x1xi1>
    %88 = vector.broadcast %87 : vector<2x1xi1> to vector<2x128xi1>
    %89 = arith.select %88, %84, %49 : vector<2x128xi1>, vector<2x128xf32>
    %90 = vector.shape_cast %86 : vector<2x1xi1> to vector<2x1xi1>
    %91 = vector.broadcast %90 : vector<2x1xi1> to vector<2x128xi1>
    %92 = arith.select %91, %82, %52 : vector<2x128xi1>, vector<2x128xf32>
    %c0_i32_33 = arith.constant 0 : i32
    %93 = arith.cmpi eq, %arg0, %c0_i32_33 : i32
    %c2_i32 = arith.constant 2 : i32
    %c5_i32 = arith.constant 5 : i32
    %94 = arith.select %93, %c2_i32, %c5_i32 : i32
    %c4 = arith.constant 4 : index
    %c0_34 = arith.constant 0 : index
    %95 = vector.load %arg8[%c4, %c0_34] : memref<16x512xf32, #tpu.memory_space<vmem>>, vector<2x512xf32>
    %c0_35 = arith.constant 0 : index
    %c0_36 = arith.constant 0 : index
    %c0_37 = arith.constant 0 : index
    %96 = vector.load %arg5[%c0_35, %c0_36, %c0_37] : memref<1x128x512xf32, #tpu.memory_space<vmem>>, vector<1x128x512xf32>
    %97 = vector.shape_cast %96 : vector<1x128x512xf32> to vector<128x512xf32>
    %cst_38 = arith.constant dense<0.000000e+00> : vector<2x512xf32>
    %98 = tpu.matmul %89, %97, %cst_38 {dimension_numbers = #tpu.dot_dimension_numbers<[1], [0], [0], [1], [0, 0, 1, 1], [], []>} : vector<2x128xf32>, vector<128x512xf32>, vector<2x512xf32> -> vector<2x512xf32>
    %99 = arith.addf %95, %98 : vector<2x512xf32>
    %100 = vector.extract_strided_slice %99 {offsets = [0, 0], sizes = [2, 128], strides = [1, 1]} : vector<2x512xf32> to vector<2x128xf32>
    %101 = arith.negf %100 : vector<2x128xf32>
    %102 = math.exp %101 : vector<2x128xf32>
    %cst_39 = arith.constant 1.000000e+00 : f32
    %103 = vector.broadcast %cst_39 : f32 to vector<2x128xf32>
    %104 = arith.addf %103, %102 : vector<2x128xf32>
    %105 = arith.divf %103, %104 : vector<2x128xf32>
    %106 = vector.extract_strided_slice %99 {offsets = [0, 128], sizes = [2, 128], strides = [1, 1]} : vector<2x512xf32> to vector<2x128xf32>
    %107 = arith.negf %106 : vector<2x128xf32>
    %108 = math.exp %107 : vector<2x128xf32>
    %cst_40 = arith.constant 1.000000e+00 : f32
    %109 = vector.broadcast %cst_40 : f32 to vector<2x128xf32>
    %110 = arith.addf %109, %108 : vector<2x128xf32>
    %111 = arith.divf %109, %110 : vector<2x128xf32>
    %112 = vector.extract_strided_slice %99 {offsets = [0, 256], sizes = [2, 128], strides = [1, 1]} : vector<2x512xf32> to vector<2x128xf32>
    %113 = math.tanh %112 : vector<2x128xf32>
    %114 = vector.extract_strided_slice %99 {offsets = [0, 384], sizes = [2, 128], strides = [1, 1]} : vector<2x512xf32> to vector<2x128xf32>
    %115 = arith.negf %114 : vector<2x128xf32>
    %116 = math.exp %115 : vector<2x128xf32>
    %cst_41 = arith.constant 1.000000e+00 : f32
    %117 = vector.broadcast %cst_41 : f32 to vector<2x128xf32>
    %118 = arith.addf %117, %116 : vector<2x128xf32>
    %119 = arith.divf %117, %118 : vector<2x128xf32>
    %120 = arith.mulf %111, %92 : vector<2x128xf32>
    %121 = arith.mulf %105, %113 : vector<2x128xf32>
    %122 = arith.addf %120, %121 : vector<2x128xf32>
    %123 = math.tanh %122 : vector<2x128xf32>
    %124 = arith.mulf %119, %123 : vector<2x128xf32>
    %125 = vector.broadcast %94 : i32 to vector<2x1xi32>
    %126 = arith.cmpi slt, %125, %0 : vector<2x1xi32>
    %127 = vector.shape_cast %126 : vector<2x1xi1> to vector<2x1xi1>
    %128 = vector.broadcast %127 : vector<2x1xi1> to vector<2x128xi1>
    %129 = arith.select %128, %124, %89 : vector<2x128xi1>, vector<2x128xf32>
    %130 = vector.shape_cast %126 : vector<2x1xi1> to vector<2x1xi1>
    %131 = vector.broadcast %130 : vector<2x1xi1> to vector<2x128xi1>
    %132 = arith.select %131, %122, %92 : vector<2x128xi1>, vector<2x128xf32>
    %c0_i32_42 = arith.constant 0 : i32
    %133 = arith.cmpi eq, %arg0, %c0_i32_42 : i32
    %c3_i32 = arith.constant 3 : i32
    %c4_i32 = arith.constant 4 : i32
    %134 = arith.select %133, %c3_i32, %c4_i32 : i32
    %c6 = arith.constant 6 : index
    %c0_43 = arith.constant 0 : index
    %135 = vector.load %arg8[%c6, %c0_43] : memref<16x512xf32, #tpu.memory_space<vmem>>, vector<2x512xf32>
    %c0_44 = arith.constant 0 : index
    %c0_45 = arith.constant 0 : index
    %c0_46 = arith.constant 0 : index
    %136 = vector.load %arg5[%c0_44, %c0_45, %c0_46] : memref<1x128x512xf32, #tpu.memory_space<vmem>>, vector<1x128x512xf32>
    %137 = vector.shape_cast %136 : vector<1x128x512xf32> to vector<128x512xf32>
    %cst_47 = arith.constant dense<0.000000e+00> : vector<2x512xf32>
    %138 = tpu.matmul %129, %137, %cst_47 {dimension_numbers = #tpu.dot_dimension_numbers<[1], [0], [0], [1], [0, 0, 1, 1], [], []>} : vector<2x128xf32>, vector<128x512xf32>, vector<2x512xf32> -> vector<2x512xf32>
    %139 = arith.addf %135, %138 : vector<2x512xf32>
    %140 = vector.extract_strided_slice %139 {offsets = [0, 0], sizes = [2, 128], strides = [1, 1]} : vector<2x512xf32> to vector<2x128xf32>
    %141 = arith.negf %140 : vector<2x128xf32>
    %142 = math.exp %141 : vector<2x128xf32>
    %cst_48 = arith.constant 1.000000e+00 : f32
    %143 = vector.broadcast %cst_48 : f32 to vector<2x128xf32>
    %144 = arith.addf %143, %142 : vector<2x128xf32>
    %145 = arith.divf %143, %144 : vector<2x128xf32>
    %146 = vector.extract_strided_slice %139 {offsets = [0, 128], sizes = [2, 128], strides = [1, 1]} : vector<2x512xf32> to vector<2x128xf32>
    %147 = arith.negf %146 : vector<2x128xf32>
    %148 = math.exp %147 : vector<2x128xf32>
    %cst_49 = arith.constant 1.000000e+00 : f32
    %149 = vector.broadcast %cst_49 : f32 to vector<2x128xf32>
    %150 = arith.addf %149, %148 : vector<2x128xf32>
    %151 = arith.divf %149, %150 : vector<2x128xf32>
    %152 = vector.extract_strided_slice %139 {offsets = [0, 256], sizes = [2, 128], strides = [1, 1]} : vector<2x512xf32> to vector<2x128xf32>
    %153 = math.tanh %152 : vector<2x128xf32>
    %154 = vector.extract_strided_slice %139 {offsets = [0, 384], sizes = [2, 128], strides = [1, 1]} : vector<2x512xf32> to vector<2x128xf32>
    %155 = arith.negf %154 : vector<2x128xf32>
    %156 = math.exp %155 : vector<2x128xf32>
    %cst_50 = arith.constant 1.000000e+00 : f32
    %157 = vector.broadcast %cst_50 : f32 to vector<2x128xf32>
    %158 = arith.addf %157, %156 : vector<2x128xf32>
    %159 = arith.divf %157, %158 : vector<2x128xf32>
    %160 = arith.mulf %151, %132 : vector<2x128xf32>
    %161 = arith.mulf %145, %153 : vector<2x128xf32>
    %162 = arith.addf %160, %161 : vector<2x128xf32>
    %163 = math.tanh %162 : vector<2x128xf32>
    %164 = arith.mulf %159, %163 : vector<2x128xf32>
    %165 = vector.broadcast %134 : i32 to vector<2x1xi32>
    %166 = arith.cmpi slt, %165, %0 : vector<2x1xi32>
    %167 = vector.shape_cast %166 : vector<2x1xi1> to vector<2x1xi1>
    %168 = vector.broadcast %167 : vector<2x1xi1> to vector<2x128xi1>
    %169 = arith.select %168, %164, %129 : vector<2x128xi1>, vector<2x128xf32>
    %170 = vector.shape_cast %166 : vector<2x1xi1> to vector<2x1xi1>
    %171 = vector.broadcast %170 : vector<2x1xi1> to vector<2x128xi1>
    %172 = arith.select %171, %162, %132 : vector<2x128xi1>, vector<2x128xf32>
    %c0_i32_51 = arith.constant 0 : i32
    %173 = arith.cmpi eq, %arg0, %c0_i32_51 : i32
    %c4_i32_52 = arith.constant 4 : i32
    %c3_i32_53 = arith.constant 3 : i32
    %174 = arith.select %173, %c4_i32_52, %c3_i32_53 : i32
    %c8 = arith.constant 8 : index
    %c0_54 = arith.constant 0 : index
    %175 = vector.load %arg8[%c8, %c0_54] : memref<16x512xf32, #tpu.memory_space<vmem>>, vector<2x512xf32>
    %c0_55 = arith.constant 0 : index
    %c0_56 = arith.constant 0 : index
    %c0_57 = arith.constant 0 : index
    %176 = vector.load %arg5[%c0_55, %c0_56, %c0_57] : memref<1x128x512xf32, #tpu.memory_space<vmem>>, vector<1x128x512xf32>
    %177 = vector.shape_cast %176 : vector<1x128x512xf32> to vector<128x512xf32>
    %cst_58 = arith.constant dense<0.000000e+00> : vector<2x512xf32>
    %178 = tpu.matmul %169, %177, %cst_58 {dimension_numbers = #tpu.dot_dimension_numbers<[1], [0], [0], [1], [0, 0, 1, 1], [], []>} : vector<2x128xf32>, vector<128x512xf32>, vector<2x512xf32> -> vector<2x512xf32>
    %179 = arith.addf %175, %178 : vector<2x512xf32>
    %180 = vector.extract_strided_slice %179 {offsets = [0, 0], sizes = [2, 128], strides = [1, 1]} : vector<2x512xf32> to vector<2x128xf32>
    %181 = arith.negf %180 : vector<2x128xf32>
    %182 = math.exp %181 : vector<2x128xf32>
    %cst_59 = arith.constant 1.000000e+00 : f32
    %183 = vector.broadcast %cst_59 : f32 to vector<2x128xf32>
    %184 = arith.addf %183, %182 : vector<2x128xf32>
    %185 = arith.divf %183, %184 : vector<2x128xf32>
    %186 = vector.extract_strided_slice %179 {offsets = [0, 128], sizes = [2, 128], strides = [1, 1]} : vector<2x512xf32> to vector<2x128xf32>
    %187 = arith.negf %186 : vector<2x128xf32>
    %188 = math.exp %187 : vector<2x128xf32>
    %cst_60 = arith.constant 1.000000e+00 : f32
    %189 = vector.broadcast %cst_60 : f32 to vector<2x128xf32>
    %190 = arith.addf %189, %188 : vector<2x128xf32>
    %191 = arith.divf %189, %190 : vector<2x128xf32>
    %192 = vector.extract_strided_slice %179 {offsets = [0, 256], sizes = [2, 128], strides = [1, 1]} : vector<2x512xf32> to vector<2x128xf32>
    %193 = math.tanh %192 : vector<2x128xf32>
    %194 = vector.extract_strided_slice %179 {offsets = [0, 384], sizes = [2, 128], strides = [1, 1]} : vector<2x512xf32> to vector<2x128xf32>
    %195 = arith.negf %194 : vector<2x128xf32>
    %196 = math.exp %195 : vector<2x128xf32>
    %cst_61 = arith.constant 1.000000e+00 : f32
    %197 = vector.broadcast %cst_61 : f32 to vector<2x128xf32>
    %198 = arith.addf %197, %196 : vector<2x128xf32>
    %199 = arith.divf %197, %198 : vector<2x128xf32>
    %200 = arith.mulf %191, %172 : vector<2x128xf32>
    %201 = arith.mulf %185, %193 : vector<2x128xf32>
    %202 = arith.addf %200, %201 : vector<2x128xf32>
    %203 = math.tanh %202 : vector<2x128xf32>
    %204 = arith.mulf %199, %203 : vector<2x128xf32>
    %205 = vector.broadcast %174 : i32 to vector<2x1xi32>
    %206 = arith.cmpi slt, %205, %0 : vector<2x1xi32>
    %207 = vector.shape_cast %206 : vector<2x1xi1> to vector<2x1xi1>
    %208 = vector.broadcast %207 : vector<2x1xi1> to vector<2x128xi1>
    %209 = arith.select %208, %204, %169 : vector<2x128xi1>, vector<2x128xf32>
    %210 = vector.shape_cast %206 : vector<2x1xi1> to vector<2x1xi1>
    %211 = vector.broadcast %210 : vector<2x1xi1> to vector<2x128xi1>
    %212 = arith.select %211, %202, %172 : vector<2x128xi1>, vector<2x128xf32>
    %c0_i32_62 = arith.constant 0 : i32
    %213 = arith.cmpi eq, %arg0, %c0_i32_62 : i32
    %c5_i32_63 = arith.constant 5 : i32
    %c2_i32_64 = arith.constant 2 : i32
    %214 = arith.select %213, %c5_i32_63, %c2_i32_64 : i32
    %c10 = arith.constant 10 : index
    %c0_65 = arith.constant 0 : index
    %215 = vector.load %arg8[%c10, %c0_65] : memref<16x512xf32, #tpu.memory_space<vmem>>, vector<2x512xf32>
    %c0_66 = arith.constant 0 : index
    %c0_67 = arith.constant 0 : index
    %c0_68 = arith.constant 0 : index
    %216 = vector.load %arg5[%c0_66, %c0_67, %c0_68] : memref<1x128x512xf32, #tpu.memory_space<vmem>>, vector<1x128x512xf32>
    %217 = vector.shape_cast %216 : vector<1x128x512xf32> to vector<128x512xf32>
    %cst_69 = arith.constant dense<0.000000e+00> : vector<2x512xf32>
    %218 = tpu.matmul %209, %217, %cst_69 {dimension_numbers = #tpu.dot_dimension_numbers<[1], [0], [0], [1], [0, 0, 1, 1], [], []>} : vector<2x128xf32>, vector<128x512xf32>, vector<2x512xf32> -> vector<2x512xf32>
    %219 = arith.addf %215, %218 : vector<2x512xf32>
    %220 = vector.extract_strided_slice %219 {offsets = [0, 0], sizes = [2, 128], strides = [1, 1]} : vector<2x512xf32> to vector<2x128xf32>
    %221 = arith.negf %220 : vector<2x128xf32>
    %222 = math.exp %221 : vector<2x128xf32>
    %cst_70 = arith.constant 1.000000e+00 : f32
    %223 = vector.broadcast %cst_70 : f32 to vector<2x128xf32>
    %224 = arith.addf %223, %222 : vector<2x128xf32>
    %225 = arith.divf %223, %224 : vector<2x128xf32>
    %226 = vector.extract_strided_slice %219 {offsets = [0, 128], sizes = [2, 128], strides = [1, 1]} : vector<2x512xf32> to vector<2x128xf32>
    %227 = arith.negf %226 : vector<2x128xf32>
    %228 = math.exp %227 : vector<2x128xf32>
    %cst_71 = arith.constant 1.000000e+00 : f32
    %229 = vector.broadcast %cst_71 : f32 to vector<2x128xf32>
    %230 = arith.addf %229, %228 : vector<2x128xf32>
    %231 = arith.divf %229, %230 : vector<2x128xf32>
    %232 = vector.extract_strided_slice %219 {offsets = [0, 256], sizes = [2, 128], strides = [1, 1]} : vector<2x512xf32> to vector<2x128xf32>
    %233 = math.tanh %232 : vector<2x128xf32>
    %234 = vector.extract_strided_slice %219 {offsets = [0, 384], sizes = [2, 128], strides = [1, 1]} : vector<2x512xf32> to vector<2x128xf32>
    %235 = arith.negf %234 : vector<2x128xf32>
    %236 = math.exp %235 : vector<2x128xf32>
    %cst_72 = arith.constant 1.000000e+00 : f32
    %237 = vector.broadcast %cst_72 : f32 to vector<2x128xf32>
    %238 = arith.addf %237, %236 : vector<2x128xf32>
    %239 = arith.divf %237, %238 : vector<2x128xf32>
    %240 = arith.mulf %231, %212 : vector<2x128xf32>
    %241 = arith.mulf %225, %233 : vector<2x128xf32>
    %242 = arith.addf %240, %241 : vector<2x128xf32>
    %243 = math.tanh %242 : vector<2x128xf32>
    %244 = arith.mulf %239, %243 : vector<2x128xf32>
    %245 = vector.broadcast %214 : i32 to vector<2x1xi32>
    %246 = arith.cmpi slt, %245, %0 : vector<2x1xi32>
    %247 = vector.shape_cast %246 : vector<2x1xi1> to vector<2x1xi1>
    %248 = vector.broadcast %247 : vector<2x1xi1> to vector<2x128xi1>
    %249 = arith.select %248, %244, %209 : vector<2x128xi1>, vector<2x128xf32>
    %250 = vector.shape_cast %246 : vector<2x1xi1> to vector<2x1xi1>
    %251 = vector.broadcast %250 : vector<2x1xi1> to vector<2x128xi1>
    %252 = arith.select %251, %242, %212 : vector<2x128xi1>, vector<2x128xf32>
    %c0_i32_73 = arith.constant 0 : i32
    %253 = arith.cmpi eq, %arg0, %c0_i32_73 : i32
    %c6_i32_74 = arith.constant 6 : i32
    %c1_i32_75 = arith.constant 1 : i32
    %254 = arith.select %253, %c6_i32_74, %c1_i32_75 : i32
    %c12 = arith.constant 12 : index
    %c0_76 = arith.constant 0 : index
    %255 = vector.load %arg8[%c12, %c0_76] : memref<16x512xf32, #tpu.memory_space<vmem>>, vector<2x512xf32>
    %c0_77 = arith.constant 0 : index
    %c0_78 = arith.constant 0 : index
    %c0_79 = arith.constant 0 : index
    %256 = vector.load %arg5[%c0_77, %c0_78, %c0_79] : memref<1x128x512xf32, #tpu.memory_space<vmem>>, vector<1x128x512xf32>
    %257 = vector.shape_cast %256 : vector<1x128x512xf32> to vector<128x512xf32>
    %cst_80 = arith.constant dense<0.000000e+00> : vector<2x512xf32>
    %258 = tpu.matmul %249, %257, %cst_80 {dimension_numbers = #tpu.dot_dimension_numbers<[1], [0], [0], [1], [0, 0, 1, 1], [], []>} : vector<2x128xf32>, vector<128x512xf32>, vector<2x512xf32> -> vector<2x512xf32>
    %259 = arith.addf %255, %258 : vector<2x512xf32>
    %260 = vector.extract_strided_slice %259 {offsets = [0, 0], sizes = [2, 128], strides = [1, 1]} : vector<2x512xf32> to vector<2x128xf32>
    %261 = arith.negf %260 : vector<2x128xf32>
    %262 = math.exp %261 : vector<2x128xf32>
    %cst_81 = arith.constant 1.000000e+00 : f32
    %263 = vector.broadcast %cst_81 : f32 to vector<2x128xf32>
    %264 = arith.addf %263, %262 : vector<2x128xf32>
    %265 = arith.divf %263, %264 : vector<2x128xf32>
    %266 = vector.extract_strided_slice %259 {offsets = [0, 128], sizes = [2, 128], strides = [1, 1]} : vector<2x512xf32> to vector<2x128xf32>
    %267 = arith.negf %266 : vector<2x128xf32>
    %268 = math.exp %267 : vector<2x128xf32>
    %cst_82 = arith.constant 1.000000e+00 : f32
    %269 = vector.broadcast %cst_82 : f32 to vector<2x128xf32>
    %270 = arith.addf %269, %268 : vector<2x128xf32>
    %271 = arith.divf %269, %270 : vector<2x128xf32>
    %272 = vector.extract_strided_slice %259 {offsets = [0, 256], sizes = [2, 128], strides = [1, 1]} : vector<2x512xf32> to vector<2x128xf32>
    %273 = math.tanh %272 : vector<2x128xf32>
    %274 = vector.extract_strided_slice %259 {offsets = [0, 384], sizes = [2, 128], strides = [1, 1]} : vector<2x512xf32> to vector<2x128xf32>
    %275 = arith.negf %274 : vector<2x128xf32>
    %276 = math.exp %275 : vector<2x128xf32>
    %cst_83 = arith.constant 1.000000e+00 : f32
    %277 = vector.broadcast %cst_83 : f32 to vector<2x128xf32>
    %278 = arith.addf %277, %276 : vector<2x128xf32>
    %279 = arith.divf %277, %278 : vector<2x128xf32>
    %280 = arith.mulf %271, %252 : vector<2x128xf32>
    %281 = arith.mulf %265, %273 : vector<2x128xf32>
    %282 = arith.addf %280, %281 : vector<2x128xf32>
    %283 = math.tanh %282 : vector<2x128xf32>
    %284 = arith.mulf %279, %283 : vector<2x128xf32>
    %285 = vector.broadcast %254 : i32 to vector<2x1xi32>
    %286 = arith.cmpi slt, %285, %0 : vector<2x1xi32>
    %287 = vector.shape_cast %286 : vector<2x1xi1> to vector<2x1xi1>
    %288 = vector.broadcast %287 : vector<2x1xi1> to vector<2x128xi1>
    %289 = arith.select %288, %284, %249 : vector<2x128xi1>, vector<2x128xf32>
    %290 = vector.shape_cast %286 : vector<2x1xi1> to vector<2x1xi1>
    %291 = vector.broadcast %290 : vector<2x1xi1> to vector<2x128xi1>
    %292 = arith.select %291, %282, %252 : vector<2x128xi1>, vector<2x128xf32>
    %c0_i32_84 = arith.constant 0 : i32
    %293 = arith.cmpi eq, %arg0, %c0_i32_84 : i32
    %c7_i32_85 = arith.constant 7 : i32
    %c0_i32_86 = arith.constant 0 : i32
    %294 = arith.select %293, %c7_i32_85, %c0_i32_86 : i32
    %c14 = arith.constant 14 : index
    %c0_87 = arith.constant 0 : index
    %295 = vector.load %arg8[%c14, %c0_87] : memref<16x512xf32, #tpu.memory_space<vmem>>, vector<2x512xf32>
    %c0_88 = arith.constant 0 : index
    %c0_89 = arith.constant 0 : index
    %c0_90 = arith.constant 0 : index
    %296 = vector.load %arg5[%c0_88, %c0_89, %c0_90] : memref<1x128x512xf32, #tpu.memory_space<vmem>>, vector<1x128x512xf32>
    %297 = vector.shape_cast %296 : vector<1x128x512xf32> to vector<128x512xf32>
    %cst_91 = arith.constant dense<0.000000e+00> : vector<2x512xf32>
    %298 = tpu.matmul %289, %297, %cst_91 {dimension_numbers = #tpu.dot_dimension_numbers<[1], [0], [0], [1], [0, 0, 1, 1], [], []>} : vector<2x128xf32>, vector<128x512xf32>, vector<2x512xf32> -> vector<2x512xf32>
    %299 = arith.addf %295, %298 : vector<2x512xf32>
    %300 = vector.extract_strided_slice %299 {offsets = [0, 0], sizes = [2, 128], strides = [1, 1]} : vector<2x512xf32> to vector<2x128xf32>
    %301 = arith.negf %300 : vector<2x128xf32>
    %302 = math.exp %301 : vector<2x128xf32>
    %cst_92 = arith.constant 1.000000e+00 : f32
    %303 = vector.broadcast %cst_92 : f32 to vector<2x128xf32>
    %304 = arith.addf %303, %302 : vector<2x128xf32>
    %305 = arith.divf %303, %304 : vector<2x128xf32>
    %306 = vector.extract_strided_slice %299 {offsets = [0, 128], sizes = [2, 128], strides = [1, 1]} : vector<2x512xf32> to vector<2x128xf32>
    %307 = arith.negf %306 : vector<2x128xf32>
    %308 = math.exp %307 : vector<2x128xf32>
    %cst_93 = arith.constant 1.000000e+00 : f32
    %309 = vector.broadcast %cst_93 : f32 to vector<2x128xf32>
    %310 = arith.addf %309, %308 : vector<2x128xf32>
    %311 = arith.divf %309, %310 : vector<2x128xf32>
    %312 = vector.extract_strided_slice %299 {offsets = [0, 256], sizes = [2, 128], strides = [1, 1]} : vector<2x512xf32> to vector<2x128xf32>
    %313 = math.tanh %312 : vector<2x128xf32>
    %314 = vector.extract_strided_slice %299 {offsets = [0, 384], sizes = [2, 128], strides = [1, 1]} : vector<2x512xf32> to vector<2x128xf32>
    %315 = arith.negf %314 : vector<2x128xf32>
    %316 = math.exp %315 : vector<2x128xf32>
    %cst_94 = arith.constant 1.000000e+00 : f32
    %317 = vector.broadcast %cst_94 : f32 to vector<2x128xf32>
    %318 = arith.addf %317, %316 : vector<2x128xf32>
    %319 = arith.divf %317, %318 : vector<2x128xf32>
    %320 = arith.mulf %311, %292 : vector<2x128xf32>
    %321 = arith.mulf %305, %313 : vector<2x128xf32>
    %322 = arith.addf %320, %321 : vector<2x128xf32>
    %323 = math.tanh %322 : vector<2x128xf32>
    %324 = arith.mulf %319, %323 : vector<2x128xf32>
    %325 = vector.broadcast %294 : i32 to vector<2x1xi32>
    %326 = arith.cmpi slt, %325, %0 : vector<2x1xi32>
    %327 = vector.shape_cast %326 : vector<2x1xi1> to vector<2x1xi1>
    %328 = vector.broadcast %327 : vector<2x1xi1> to vector<2x128xi1>
    %329 = arith.select %328, %324, %289 : vector<2x128xi1>, vector<2x128xf32>
    %c0_95 = arith.constant 0 : index
    %c0_96 = arith.constant 0 : index
    %c0_97 = arith.constant 0 : index
    %330 = vector.load %arg6[%c0_95, %c0_96, %c0_97] : memref<1x128x5xf32, #tpu.memory_space<vmem>>, vector<1x128x5xf32>
    %331 = vector.shape_cast %330 : vector<1x128x5xf32> to vector<128x5xf32>
    %cst_98 = arith.constant dense<0.000000e+00> : vector<2x5xf32>
    %332 = tpu.matmul %329, %331, %cst_98 {dimension_numbers = #tpu.dot_dimension_numbers<[1], [0], [0], [1], [0, 0, 1, 1], [], []>} : vector<2x128xf32>, vector<128x5xf32>, vector<2x5xf32> -> vector<2x5xf32>
    %c0_99 = arith.constant 0 : index
    %c0_100 = arith.constant 0 : index
    %c0_101 = arith.constant 0 : index
    %333 = vector.load %arg7[%c0_99, %c0_100, %c0_101] : memref<1x2x5xf32, #tpu.memory_space<vmem>>, vector<1x2x5xf32>
    %334 = vector.shape_cast %333 : vector<1x2x5xf32> to vector<2x5xf32>
    %335 = vector.shape_cast %332 : vector<2x5xf32> to vector<1x2x5xf32>
    tpu.vector_store %arg7[%c0_99, %c0_100, %c0_101], %335 {strides = array<i32>} : memref<1x2x5xf32, #tpu.memory_space<vmem>>, vector<1x2x5xf32>,
    return
  }
  func.func @transform_0(%arg0: i32) -> (i32, i32) {
    %c0_i32 = arith.constant 0 : i32
    %c0_i32_0 = arith.constant 0 : i32
    %c0_i32_1 = arith.constant 0 : i32
    return %c0_i32, %c0_i32_0 : i32, i32
  }
  func.func @transform_1(%arg0: i32) -> (i32, i32, i32) {
    %c0_i32 = arith.constant 0 : i32
    %c0_i32_0 = arith.constant 0 : i32
    %c0_i32_1 = arith.constant 0 : i32
    return %arg0, %c0_i32, %c0_i32_0 : i32, i32, i32
  }
  func.func @transform_2(%arg0: i32) -> (i32, i32, i32) {
    %c0_i32 = arith.constant 0 : i32
    %c0_i32_0 = arith.constant 0 : i32
    %c0_i32_1 = arith.constant 0 : i32
    return %arg0, %c0_i32, %c0_i32_0 : i32, i32, i32
  }
  func.func @transform_3(%arg0: i32) -> (i32, i32, i32) {
    %c0_i32 = arith.constant 0 : i32
    %c0_i32_0 = arith.constant 0 : i32
    %c0_i32_1 = arith.constant 0 : i32
    return %arg0, %c0_i32, %c0_i32_0 : i32, i32, i32
  }
  func.func @transform_4(%arg0: i32) -> (i32, i32, i32) {
    %c0_i32 = arith.constant 0 : i32
    %c0_i32_0 = arith.constant 0 : i32
    %c0_i32_1 = arith.constant 0 : i32
    return %arg0, %c0_i32, %c0_i32_0 : i32, i32, i32
  }
  func.func @transform_5(%arg0: i32) -> (i32, i32, i32) {
    %c0_i32 = arith.constant 0 : i32
    %c0_i32_0 = arith.constant 0 : i32
    %c0_i32_1 = arith.constant 0 : i32
    return %arg0, %c0_i32, %c0_i32_0 : i32, i32, i32
  }
  func.func @transform_6(%arg0: i32) -> (i32, i32, i32) {
    %c0_i32 = arith.constant 0 : i32
    %c0_i32_0 = arith.constant 0 : i32
    %c0_i32_1 = arith.constant 0 : i32
    return %arg0, %c0_i32, %c0_i32_0 : i32, i32, i32
  }
}

</mosaic_0001>

<llo_original>
// kernel: tpu_custom_call.1
$region0: #{tpu_custom_call.1}
  #allocation0 [shape = 'u32[]', space=smem, size = 0x4, offset = 0x4, fixed_abs, tag = 'smem constant byte address 0x4 - core index']
  #allocation1 [shape = 'u32[144,128]{1,0:T(1,128)}', space=vmem, size = 0x12000, scoped, tag = 'internal scratch']
  #allocation2 [shape = 'f32[16,512]{1,0:T(8,128)}', space=vmem, size = 0x8000, scoped, tag = 'scratch operand']
  %s0 = inlined_call_operand.vmem [shape: s32[2,1], index: 0, kind: input, shape index: {}]
  %s1 = inlined_call_operand.vmem [shape: f32[2,16,56], index: 1, kind: input, shape index: {}]
  %s2 = inlined_call_operand.hbm [shape: f32[2,56,512], index: 2, kind: input, shape index: {}]
  %s3 = inlined_call_operand.vmem [shape: f32[2,1,512], index: 3, kind: input, shape index: {}]
  %s4 = inlined_call_operand.hbm [shape: f32[2,128,512], index: 4, kind: input, shape index: {}]
  %s5 = inlined_call_operand.vmem [shape: f32[2,128,5], index: 5, kind: input, shape index: {}]
  %s6 = inlined_call_operand.hbm [shape: f32[2,2,5], index: 6, kind: output, shape index: {}]
  %s7 = sld [smem:[#allocation0]]
  $region65: #{tpu_custom_call.1} parent=0
    _
  %s9 = ssub.s32 1, %s7
  %s10 = scalar_select 0, %s9, %s7
  $region1: #{tpu_custom_call.1} parent=0
    #allocation3 [shape = 'u8[229376]{0}', space=vmem, size = 0x38000, scoped, tag = 'input window, operand 2']
    #allocation4 [shape = 's32[2]{0}', space=sflag, size = 0x8, scoped, tag = 'scoped memory for tpu_custom_call.1']
    #allocation5 [shape = 's32[2]{0}', space=sflag, size = 0x8, scoped, tag = 'scoped memory for tpu_custom_call.1']
    #allocation6 [shape = 'u8[524288]{0}', space=vmem, size = 0x80000, scoped, tag = 'input window, operand 4']
    #allocation7 [shape = 's32[2]{0}', space=sflag, size = 0x8, scoped, tag = 'scoped memory for tpu_custom_call.1']
    #allocation8 [shape = 'u8[2048]{0}', space=vmem, size = 0x800, scoped, tag = 'output window, operand 0']
    %11 = vsyncpa [#allocation4], 0
    %s12 = scalar_lea.sflag [#allocation4], 1
    %13 = vsyncpa %s12, 0
    %14 = vsyncpa [#allocation7], 0
    %s15 = scalar_lea.sflag [#allocation7], 1
    %16 = vsyncpa %s15, 0
    %17 = vsyncpa [#allocation5], 0
    %s18 = scalar_lea.sflag [#allocation5], 1
    %19 = vsyncpa %s18, 0
    loop: start=0, step=1, limit=4
    $region2: #{tpu_custom_call.1} parent=1 // loop_pre_header
      _
    $region3: #{tpu_custom_call.1} parent=1 // loop_header
      %s21 = sphi 0, %s25
      %p22 = scmp.ge.s32.totalorder %s21, 4
      %s29 = sphi 0, %s29
      %s31 = sphi 0, %s29
      %s32 = sphi 0, %s31
      %s46 = sphi 0, %s32
      %s52 = sphi 0, %s54
      %s55 = sphi 0, %s52
      %s56 = sphi 0, %s55
      %s72 = sphi 0, %s56
      %s78 = sphi 0, %s80
      %s81 = sphi 0, %s78
      %s82 = sphi 0, %s81
      %s98 = sphi 0, %s82
      %s104 = sphi 0, %s106
      %s107 = sphi 0, %s104
      %s108 = sphi 0, %s107
      %s124 = sphi 0, %s108
      %s130 = sphi 0, %s132
      %s133 = sphi 0, %s130
      %s134 = sphi 0, %s133
      %s150 = sphi 0, %s134
      %s156 = sphi 0, %s158
      %s159 = sphi 0, %s156
      %s160 = sphi 0, %s159
      %s176 = sphi 0, %s160
      %s182 = sphi 0, %s184
      %s185 = sphi 0, %s182
      %s186 = sphi 0, %s185
      %s202 = sphi 0, %s186
    $region4: #{tpu_custom_call.1} parent=1 // loop_header_branch
      %24 = sbr.rel (%p22) target = $region8
    $region5: #{tpu_custom_call.1} parent=1 // loop_body
      %s26 = ssub.s32 %s21, 1
      %s27 = ssub.s32 %s21, 2
      %s28 = sadd.s32 %s21, 1
      %s30 = sadd.s32 %s29, 1
      %p33 = scmp.eq.s32.totalorder %s21, 1
      %p34 = scmp.ne.s32.totalorder %s29, %s31
      %p35 = scmp.eq.s32.totalorder %s21, 0
      %p36 = por %p34, %p35
      %p37 = scmp.ne.s32.totalorder %s29, %s31
      %p38 = scmp.eq.s32.totalorder %s26, 1
      %p39 = por %p37, %p38
      %p40 = scmp.ne.s32.totalorder %s31, %s32
      %p41 = scmp.eq.s32.totalorder %s26, 0
      %p42 = por %p40, %p41
      %p43 = scmp.ne.s32.totalorder %s31, %s32
      %p44 = scmp.eq.s32.totalorder %s27, 1
      %p45 = por %p43, %p44
      %p47 = scmp.ne.s32.totalorder %s32, %s46
      %p48 = scmp.eq.s32.totalorder %s27, 0
      %p49 = por %p47, %p48
      %s50 = ssub.s32 %s21, %s28
      %p51 = scmp.eq.s32.totalorder %s50, 0
      %s53 = sadd.s32 %s52, 1
      %s54 = scalar_select %p51, %s52, %s53
      %p57 = pneg %p51
      %p58 = scmp.eq.s32.totalorder %s21, 1
      %p59 = por %p57, %p58
      %p60 = scmp.ne.s32.totalorder %s52, %s55
      %p61 = scmp.eq.s32.totalorder %s21, 0
      %p62 = por %p60, %p61
      %p63 = scmp.ne.s32.totalorder %s52, %s55
      %p64 = scmp.eq.s32.totalorder %s26, 1
      %p65 = por %p63, %p64
      %p66 = scmp.ne.s32.totalorder %s55, %s56
      %p67 = scmp.eq.s32.totalorder %s26, 0
      %p68 = por %p66, %p67
      %p69 = scmp.ne.s32.totalorder %s55, %s56
      %p70 = scmp.eq.s32.totalorder %s27, 1
      %p71 = por %p69, %p70
      %p73 = scmp.ne.s32.totalorder %s56, %s72
      %p74 = scmp.eq.s32.totalorder %s27, 0
      %p75 = por %p73, %p74
      %s76 = ssub.s32 %s21, %s28
      %p77 = scmp.eq.s32.totalorder %s76, 0
      %s79 = sadd.s32 %s78, 1
      %s80 = scalar_select %p77, %s78, %s79
      %p83 = pneg %p77
      %p84 = scmp.eq.s32.totalorder %s21, 1
      %p85 = por %p83, %p84
      %p86 = scmp.ne.s32.totalorder %s78, %s81
      %p87 = scmp.eq.s32.totalorder %s21, 0
      %p88 = por %p86, %p87
      %p89 = scmp.ne.s32.totalorder %s78, %s81
      %p90 = scmp.eq.s32.totalorder %s26, 1
      %p91 = por %p89, %p90
      %p92 = scmp.ne.s32.totalorder %s81, %s82
      %p93 = scmp.eq.s32.totalorder %s26, 0
      %p94 = por %p92, %p93
      %p95 = scmp.ne.s32.totalorder %s81, %s82
      %p96 = scmp.eq.s32.totalorder %s27, 1
      %p97 = por %p95, %p96
      %p99 = scmp.ne.s32.totalorder %s82, %s98
      %p100 = scmp.eq.s32.totalorder %s27, 0
      %p101 = por %p99, %p100
      %s102 = ssub.s32 %s21, %s28
      %p103 = scmp.eq.s32.totalorder %s102, 0
      %s105 = sadd.s32 %s104, 1
      %s106 = scalar_select %p103, %s104, %s105
      %p109 = pneg %p103
      %p110 = scmp.eq.s32.totalorder %s21, 1
      %p111 = por %p109, %p110
      %p112 = scmp.ne.s32.totalorder %s104, %s107
      %p113 = scmp.eq.s32.totalorder %s21, 0
      %p114 = por %p112, %p113
      %p115 = scmp.ne.s32.totalorder %s104, %s107
      %p116 = scmp.eq.s32.totalorder %s26, 1
      %p117 = por %p115, %p116
      %p118 = scmp.ne.s32.totalorder %s107, %s108
      %p119 = scmp.eq.s32.totalorder %s26, 0
      %p120 = por %p118, %p119
      %p121 = scmp.ne.s32.totalorder %s107, %s108
      %p122 = scmp.eq.s32.totalorder %s27, 1
      %p123 = por %p121, %p122
      %p125 = scmp.ne.s32.totalorder %s108, %s124
      %p126 = scmp.eq.s32.totalorder %s27, 0
      %p127 = por %p125, %p126
      %s128 = ssub.s32 %s21, %s28
      %p129 = scmp.eq.s32.totalorder %s128, 0
      %s131 = sadd.s32 %s130, 1
      %s132 = scalar_select %p129, %s130, %s131
      %p135 = pneg %p129
      %p136 = scmp.eq.s32.totalorder %s21, 1
      %p137 = por %p135, %p136
      %p138 = scmp.ne.s32.totalorder %s130, %s133
      %p139 = scmp.eq.s32.totalorder %s21, 0
      %p140 = por %p138, %p139
      %p141 = scmp.ne.s32.totalorder %s130, %s133
      %p142 = scmp.eq.s32.totalorder %s26, 1
      %p143 = por %p141, %p142
      %p144 = scmp.ne.s32.totalorder %s133, %s134
      %p145 = scmp.eq.s32.totalorder %s26, 0
      %p146 = por %p144, %p145
      %p147 = scmp.ne.s32.totalorder %s133, %s134
      %p148 = scmp.eq.s32.totalorder %s27, 1
      %p149 = por %p147, %p148
      %p151 = scmp.ne.s32.totalorder %s134, %s150
      %p152 = scmp.eq.s32.totalorder %s27, 0
      %p153 = por %p151, %p152
      %s154 = ssub.s32 %s21, %s28
      %p155 = scmp.eq.s32.totalorder %s154, 0
      %s157 = sadd.s32 %s156, 1
      %s158 = scalar_select %p155, %s156, %s157
      %p161 = pneg %p155
      %p162 = scmp.eq.s32.totalorder %s21, 1
      %p163 = por %p161, %p162
      %p164 = scmp.ne.s32.totalorder %s156, %s159
      %p165 = scmp.eq.s32.totalorder %s21, 0
      %p166 = por %p164, %p165
      %p167 = scmp.ne.s32.totalorder %s156, %s159
      %p168 = scmp.eq.s32.totalorder %s26, 1
      %p169 = por %p167, %p168
      %p170 = scmp.ne.s32.totalorder %s159, %s160
      %p171 = scmp.eq.s32.totalorder %s26, 0
      %p172 = por %p170, %p171
      %p173 = scmp.ne.s32.totalorder %s159, %s160
      %p174 = scmp.eq.s32.totalorder %s27, 1
      %p175 = por %p173, %p174
      %p177 = scmp.ne.s32.totalorder %s160, %s176
      %p178 = scmp.eq.s32.totalorder %s27, 0
      %p179 = por %p177, %p178
      %s180 = ssub.s32 %s21, %s28
      %p181 = scmp.eq.s32.totalorder %s180, 0
      %s183 = sadd.s32 %s182, 1
      %s184 = scalar_select %p181, %s182, %s183
      %p187 = pneg %p181
      %p188 = scmp.eq.s32.totalorder %s21, 1
      %p189 = por %p187, %p188
      %p190 = scmp.ne.s32.totalorder %s182, %s185
      %p191 = scmp.eq.s32.totalorder %s21, 0
      %p192 = por %p190, %p191
      %p193 = scmp.ne.s32.totalorder %s182, %s185
      %p194 = scmp.eq.s32.totalorder %s26, 1
      %p195 = por %p193, %p194
      %p196 = scmp.ne.s32.totalorder %s185, %s186
      %p197 = scmp.eq.s32.totalorder %s26, 0
      %p198 = por %p196, %p197
      %p199 = scmp.ne.s32.totalorder %s185, %s186
      %p200 = scmp.eq.s32.totalorder %s27, 1
      %p201 = por %p199, %p200
      %p203 = scmp.ne.s32.totalorder %s186, %s202
      %p204 = scmp.eq.s32.totalorder %s27, 0
      %p205 = por %p203, %p204
      %p206 = scmp.le.s32.totalorder 1, %s21
      %p207 = scmp.lt.s32.totalorder %s21, 3
      %p208 = pnand %p206, %p207
      %p209 = pneg %p208
      // Predicated region
      $region9: #{tpu_custom_call.1} parent=5 // pred_check
        _
      $region10: #{tpu_custom_call.1} parent=5 // pred_check_branch
        %211 = sbr.rel (%p208) target = $region12
      $region11: #{tpu_custom_call.1} parent=5 // pred_region
        %s212 = ssub.s32 %s21, 1
        // Predicated region
        $region13: #{tpu_custom_call.1} parent=11 // pred_check
          %p213 = pneg %p42
        $region14: #{tpu_custom_call.1} parent=11 // pred_check_branch
          %215 = sbr.rel (%p213) target = $region16
        $region15: #{tpu_custom_call.1} parent=11 // pred_region
          _
        $region16: #{tpu_custom_call.1} parent=11 // pred_fallthru
          _
      $region12: #{tpu_custom_call.1} parent=5 // pred_fallthru
        _
      %p216 = scmp.lt.s32.totalorder %s21, 2
      // Predicated region
      $region17: #{tpu_custom_call.1} parent=5 // pred_check
        %p217 = pneg %p216
      $region18: #{tpu_custom_call.1} parent=5 // pred_check_branch
        %219 = sbr.rel (%p217) target = $region20
      $region19: #{tpu_custom_call.1} parent=5 // pred_region
        // Predicated region
        $region21: #{tpu_custom_call.1} parent=19 // pred_check
          %p220 = pneg %p62
        $region22: #{tpu_custom_call.1} parent=19 // pred_check_branch
          %222 = sbr.rel (%p220) target = $region24
        $region23: #{tpu_custom_call.1} parent=19 // pred_region
          %p223 = scmp.lt.s32.totalorder %s21, 1
          %s224 = scalar_select %p223, %s21, 1
          %s225 = smul.addr %s224, 2
          %s226 = smul.addr %s225, 8
          %s227 = scalar_lea.vmem %s1, %s226
        $region24: #{tpu_custom_call.1} parent=19 // pred_fallthru
          _
        // Predicated region
        $region25: #{tpu_custom_call.1} parent=19 // pred_check
          %p228 = pneg %p88
        $region26: #{tpu_custom_call.1} parent=19 // pred_check_branch
          %230 = sbr.rel (%p228) target = $region28
        $region27: #{tpu_custom_call.1} parent=19 // pred_region
          %s231 = sand.u32 %s78, 1
          %s232 = scalar_lea.sflag [#allocation4], %s231
          %s233 = sand.u32 %s78, 1
          %s234 = smul.addr %s233, 224
          %s235 = scalar_lea.vmem [#allocation3], %s234
          %s237 = ssub.s32 3584, 3584
          %238 = vsyncadd %s232, %s237
          %s239 = smul.addr %s21, 28
          %s240 = smul.addr %s239, 128
          %s241 = scalar_lea.hbm %s2, %s240
          %s242 = sshll.u32 %s235, 4
          %s243 = int_to_ptr.vmem [resolvable:$true] %s242
          %248 = dma.hbm_to_vmem [thread:$0]  %s241, 3584, %s243, %s232, 512, 512, 32
        $region28: #{tpu_custom_call.1} parent=19 // pred_fallthru
          _
        // Predicated region
        $region29: #{tpu_custom_call.1} parent=19 // pred_check
          %p249 = pneg %p114
        $region30: #{tpu_custom_call.1} parent=19 // pred_check_branch
          %251 = sbr.rel (%p249) target = $region32
        $region31: #{tpu_custom_call.1} parent=19 // pred_region
          %p252 = scmp.lt.s32.totalorder %s21, 1
          %s253 = scalar_select %p252, %s21, 1
          %s254 = smul.addr %s253, 4
          %s255 = scalar_lea.vmem %s3, %s254
        $region32: #{tpu_custom_call.1} parent=19 // pred_fallthru
          _
        // Predicated region
        $region33: #{tpu_custom_call.1} parent=19 // pred_check
          %p256 = pneg %p140
        $region34: #{tpu_custom_call.1} parent=19 // pred_check_branch
          %258 = sbr.rel (%p256) target = $region36
        $region35: #{tpu_custom_call.1} parent=19 // pred_region
          %s259 = sand.u32 %s130, 1
          %s260 = scalar_lea.sflag [#allocation7], %s259
          %s261 = sand.u32 %s130, 1
          %s262 = smul.addr %s261, 512
          %s263 = scalar_lea.vmem [#allocation6], %s262
          %s265 = ssub.s32 8192, 8192
          %266 = vsyncadd %s260, %s265
          %s267 = smul.addr %s21, 64
          %s268 = smul.addr %s267, 128
          %s269 = scalar_lea.hbm %s4, %s268
          %s270 = sshll.u32 %s263, 4
          %s271 = int_to_ptr.vmem [resolvable:$true] %s270
          %276 = dma.hbm_to_vmem [thread:$0]  %s269, 8192, %s271, %s260, 512, 512, 32
        $region36: #{tpu_custom_call.1} parent=19 // pred_fallthru
          _
        // Predicated region
        $region37: #{tpu_custom_call.1} parent=19 // pred_check
          %p277 = pneg %p166
        $region38: #{tpu_custom_call.1} parent=19 // pred_check_branch
          %279 = sbr.rel (%p277) target = $region40
        $region39: #{tpu_custom_call.1} parent=19 // pred_region
          %p280 = scmp.lt.s32.totalorder %s21, 1
          %s281 = scalar_select %p280, %s21, 1
          %s282 = smul.addr %s281, 16
          %s283 = smul.addr %s282, 8
          %s284 = scalar_lea.vmem %s5, %s283
        $region40: #{tpu_custom_call.1} parent=19 // pred_fallthru
          _
      $region20: #{tpu_custom_call.1} parent=5 // pred_fallthru
        _
      %p285 = scmp.le.s32.totalorder 1, %s21
      %p286 = scmp.lt.s32.totalorder %s21, 3
      %p287 = pnand %p285, %p286
      %p288 = pneg %p287
      // Predicated region
      $region41: #{tpu_custom_call.1} parent=5 // pred_check
        _
      $region42: #{tpu_custom_call.1} parent=5 // pred_check_branch
        %290 = sbr.rel (%p287) target = $region44
      $region43: #{tpu_custom_call.1} parent=5 // pred_region
        %s291 = ssub.s32 %s21, 1
        %s292 = sand.u32 %s81, 1
        %s293 = scalar_lea.sflag [#allocation4], %s292
        %s294 = sand.u32 %s81, 1
        %s295 = smul.addr %s294, 224
        %s296 = scalar_lea.vmem [#allocation3], %s295
        // Predicated region
        $region45: #{tpu_custom_call.1} parent=43 // pred_check
          %p297 = pneg %p94
        $region46: #{tpu_custom_call.1} parent=43 // pred_check_branch
          %299 = sbr.rel (%p297) target = $region48
        $region47: #{tpu_custom_call.1} parent=43 // pred_region
          %300 = dma.done %s293, 3584
        $region48: #{tpu_custom_call.1} parent=43 // pred_fallthru
          _
        %s301 = sand.u32 %s133, 1
        %s302 = scalar_lea.sflag [#allocation7], %s301
        %s303 = sand.u32 %s133, 1
        %s304 = smul.addr %s303, 512
        %s305 = scalar_lea.vmem [#allocation6], %s304
        // Predicated region
        $region49: #{tpu_custom_call.1} parent=43 // pred_check
          %p306 = pneg %p146
        $region50: #{tpu_custom_call.1} parent=43 // pred_check_branch
          %308 = sbr.rel (%p306) target = $region52
        $region51: #{tpu_custom_call.1} parent=43 // pred_region
          %309 = dma.done %s302, 8192
        $region52: #{tpu_custom_call.1} parent=43 // pred_fallthru
          _
        %p310 = pneg %p42
        %p311 = pneg %p39
        %p312 = scmp.lt.s32.totalorder %s26, 1
        %s313 = scalar_select %p312, %s26, 1
        %s314 = smul.addr %s313, 2
        %s315 = smul.addr %s314, 8
        %s316 = scalar_lea.vmem %s1, %s315
        %p317 = pneg %p68
        %p318 = pneg %p65
        %s319 = sand.u32 %s81, 1
        %s320 = scalar_lea.sflag [#allocation4], %s319
        %s321 = sand.u32 %s81, 1
        %s322 = smul.addr %s321, 224
        %s323 = scalar_lea.vmem [#allocation3], %s322
        %p324 = pneg %p94
        %p325 = pneg %p91
        %p326 = scmp.lt.s32.totalorder %s26, 1
        %s327 = scalar_select %p326, %s26, 1
        %s328 = smul.addr %s327, 4
        %s329 = scalar_lea.vmem %s3, %s328
        %p330 = pneg %p120
        %p331 = pneg %p117
        %s332 = sand.u32 %s133, 1
        %s333 = scalar_lea.sflag [#allocation7], %s332
        %s334 = sand.u32 %s133, 1
        %s335 = smul.addr %s334, 512
        %s336 = scalar_lea.vmem [#allocation6], %s335
        %p337 = pneg %p146
        %p338 = pneg %p143
        %p339 = scmp.lt.s32.totalorder %s26, 1
        %s340 = scalar_select %p339, %s26, 1
        %s341 = smul.addr %s340, 16
        %s342 = smul.addr %s341, 8
        %s343 = scalar_lea.vmem %s5, %s342
        %p344 = pneg %p172
        %p345 = pneg %p169
        %p346 = pneg %p198
        %p347 = pneg %p195
        %s348 = sand.u32 %s185, 1
        %s349 = scalar_lea.sflag [#allocation5], %s348
        %s350 = sand.u32 %s185, 1
        %s351 = smul.addr %s350, 2
        %s352 = scalar_lea.vmem [#allocation8], %s351
        %p353 = scmp.lt.s32.totalorder %s26, 1
        %s354 = scalar_select %p353, %s26, 1
        %s355 = smul.addr %s354, 2
        %s356 = smul.addr %s355, 8
        %s357 = scalar_lea.vmem %s1, %s356
        %p358 = scmp.lt.s32.totalorder %s26, 1
        %s359 = scalar_select %p358, %s26, 1
        %s360 = smul.addr %s359, 4
        %s361 = scalar_lea.vmem %s3, %s360
        %p362 = scmp.lt.s32.totalorder %s26, 1
        %s363 = scalar_select %p362, %s26, 1
        %s364 = smul.addr %s363, 16
        %s365 = smul.addr %s364, 8
        %s366 = scalar_lea.vmem %s5, %s365
        %v367 = vld [vmem:[%s0] sm:$0x3]
        %v368 = vld [vmem:[%s357] sm:$0xff]
        %v369 = vld [vmem:[%s357 + $0x8] sm:$0xff]
        %v370 = vld [vmem:[%s296] sm:$0xff]
        %v371 = vld [vmem:[%s296 + $0x8] sm:$0xff]
        %v372 = vld [vmem:[%s296 + $0x10] sm:$0xff]
        %v373 = vld [vmem:[%s296 + $0x18] sm:$0xff]
        %v374 = vld [vmem:[%s296 + $0x20] sm:$0xff]
        %v375 = vld [vmem:[%s296 + $0x28] sm:$0xff]
        %v376 = vld [vmem:[%s296 + $0x30] sm:$0xff]
        %v377 = vld [vmem:[%s296 + $0x38] sm:$0xff]
        %v378 = vld [vmem:[%s296 + $0x40] sm:$0xff]
        %v379 = vld [vmem:[%s296 + $0x48] sm:$0xff]
        %v380 = vld [vmem:[%s296 + $0x50] sm:$0xff]
        %v381 = vld [vmem:[%s296 + $0x58] sm:$0xff]
        %v382 = vld [vmem:[%s296 + $0x60] sm:$0xff]
        %v383 = vld [vmem:[%s296 + $0x68] sm:$0xff]
        %v384 = vld [vmem:[%s296 + $0x70] sm:$0xff]
        %v385 = vld [vmem:[%s296 + $0x78] sm:$0xff]
        %v386 = vld [vmem:[%s296 + $0x80] sm:$0xff]
        %v387 = vld [vmem:[%s296 + $0x88] sm:$0xff]
        %v388 = vld [vmem:[%s296 + $0x90] sm:$0xff]
        %v389 = vld [vmem:[%s296 + $0x98] sm:$0xff]
        %v390 = vld [vmem:[%s296 + $0xa0] sm:$0xff]
        %v391 = vld [vmem:[%s296 + $0xa8] sm:$0xff]
        %v392 = vld [vmem:[%s296 + $0xb0] sm:$0xff]
        %v393 = vld [vmem:[%s296 + $0xb8] sm:$0xff]
        %v394 = vld [vmem:[%s296 + $0xc0] sm:$0xff]
        %v395 = vld [vmem:[%s296 + $0xc8] sm:$0xff]
        %v396 = vld [vmem:[%s296 + $0xd0] sm:$0xff]
        %v397 = vld [vmem:[%s296 + $0xd8] sm:$0xff]
        %v398 = vld [vmem:[%s361] sm:$0xf]
        %v400 = vlaneseq
        %v401 = vshrl.u32 %v400, 7
        %v402 = vsub.s32 0, %v401
        %v403 = vrot.slane %v398, %v402
        %v404 = vlaneseq
        %v405 = vshrl.u32 %v404, 7
        %v406 = vsub.s32 1, %v405
        %v407 = vrot.slane %v398, %v406
        %v408 = vlaneseq
        %v409 = vshrl.u32 %v408, 7
        %v410 = vsub.s32 2, %v409
        %v411 = vrot.slane %v398, %v410
        %v412 = vlaneseq
        %v413 = vshrl.u32 %v412, 7
        %v414 = vsub.s32 3, %v413
        %v415 = vrot.slane %v398, %v414
        %vm420 = vcmask 457728
        %v422 = vsel %vm420, %v368, 0
        %v425 = vsel %vm420, %v369, 0
        %427 = vmatprep.subr.mxu0 0.0
        %428 = vmatpush1.msra.mxu0 0.0
        %429 = vmatprep.subr.mxu0 0.0
        %430 = vmatpush1.msra.mxu0 0.0
        %431 = vmatprep.subr.mxu0 0.0
        %432 = vmatpush1.msra.mxu0 0.0
        %433 = vmatprep.subr.mxu0 0.0
        %434 = vmatpush1.msra.mxu0 0.0
        %435 = vmatprep.subr.mxu0 0.0
        %436 = vmatpush1.msra.mxu0 0.0
        %437 = vmatprep.subr.mxu0 0.0
        %438 = vmatpush1.msra.mxu0 0.0
        %439 = vmatprep.subr.mxu0 0.0
        %440 = vmatpush1.msra.mxu0 0.0
        %441 = vmatprep.subr.mxu0 0.0
        %442 = vmatpush1.msra.mxu0 0.0
        %443 = vmatprep.subr.mxu0 0.0
        %444 = vmatpush1.msra.mxu0 0.0
        %445 = vmatprep.subr.mxu0 %v395
        %446 = vmatpush1.msra.mxu0 %v394
        %447 = vmatprep.subr.mxu0 %v391
        %448 = vmatpush1.msra.mxu0 %v390
        %449 = vmatprep.subr.mxu0 %v387
        %450 = vmatpush1.msra.mxu0 %v386
        %451 = vmatprep.subr.mxu0 %v383
        %452 = vmatpush1.msra.mxu0 %v382
        %453 = vmatprep.subr.mxu0 %v379
        %454 = vmatpush1.msra.mxu0 %v378
        %455 = vmatprep.subr.mxu0 %v375
        %456 = vmatpush1.msra.mxu0 %v374
        %457 = vmatprep.subr.mxu0 %v371
        %458 = vmatpush1.msra.mxu0 %v370
        %459 = vmatprep.subr.mxu0 0.0
        %460 = vmatpush2.msra.mxu0 0.0
        %461 = vmatprep.subr.mxu0 0.0
        %462 = vmatpush2.msra.mxu0 0.0
        %463 = vmatprep.subr.mxu0 0.0
        %464 = vmatpush2.msra.mxu0 0.0
        %465 = vmatprep.subr.mxu0 0.0
        %466 = vmatpush2.msra.mxu0 0.0
        %467 = vmatprep.subr.mxu0 0.0
        %468 = vmatpush2.msra.mxu0 0.0
        %469 = vmatprep.subr.mxu0 0.0
        %470 = vmatpush2.msra.mxu0 0.0
        %471 = vmatprep.subr.mxu0 0.0
        %472 = vmatpush2.msra.mxu0 0.0
        %473 = vmatprep.subr.mxu0 0.0
        %474 = vmatpush2.msra.mxu0 0.0
        %475 = vmatprep.subr.mxu0 0.0
        %476 = vmatpush2.msra.mxu0 0.0
        %477 = vmatprep.subr.mxu0 0.0
        %478 = vmatpush2.msra.mxu0 0.0
        %479 = vmatprep.subr.mxu0 0.0
        %480 = vmatpush2.msra.mxu0 0.0
        %481 = vmatprep.subr.mxu0 0.0
        %482 = vmatpush2.msra.mxu0 0.0
        %483 = vmatprep.subr.mxu0 0.0
        %484 = vmatpush2.msra.mxu0 0.0
        %485 = vmatprep.subr.mxu0 0.0
        %486 = vmatpush2.msra.mxu0 0.0
        %487 = vmatprep.subr.mxu0 0.0
        %488 = vmatpush2.msra.mxu0 0.0
        %489 = vmatprep.subr.mxu0 0.0
        %490 = vmatpush2.msra.mxu0 0.0
        %491 = vmatprep.mubr.f32.mxu0 0.0
        %492 = vmatmul.mubr.f32.gmra.mxu0 %v422
        %v493 = vpop.f32.mrf.mxu0
        %v494 = vadd.f32 %v403, %v493
        %v495 = vpop.f32.mrf.mxu0
        %v496 = vadd.f32 %v407, %v495
        %497 = vmatprep.mubr.f32.mxu0 0.0
        %498 = vmatmul.mubr.f32.gmra.mxu0 %v425
        %v499 = vpop.f32.mrf.mxu0
        %v500 = vadd.f32 %v403, %v499
        %v501 = vpop.f32.mrf.mxu0
        %v502 = vadd.f32 %v407, %v501
        %503 = vdwg.mxu0
        %504 = vmatprep.subr.mxu0 0.0
        %505 = vmatpush1.msra.mxu0 0.0
        %506 = vmatprep.subr.mxu0 0.0
        %507 = vmatpush1.msra.mxu0 0.0
        %508 = vmatprep.subr.mxu0 0.0
        %509 = vmatpush1.msra.mxu0 0.0
        %510 = vmatprep.subr.mxu0 0.0
        %511 = vmatpush1.msra.mxu0 0.0
        %512 = vmatprep.subr.mxu0 0.0
        %513 = vmatpush1.msra.mxu0 0.0
        %514 = vmatprep.subr.mxu0 0.0
        %515 = vmatpush1.msra.mxu0 0.0
        %516 = vmatprep.subr.mxu0 0.0
        %517 = vmatpush1.msra.mxu0 0.0
        %518 = vmatprep.subr.mxu0 0.0
        %519 = vmatpush1.msra.mxu0 0.0
        %520 = vmatprep.subr.mxu0 0.0
        %521 = vmatpush1.msra.mxu0 0.0
        %522 = vmatprep.subr.mxu0 %v397
        %523 = vmatpush1.msra.mxu0 %v396
        %524 = vmatprep.subr.mxu0 %v393
        %525 = vmatpush1.msra.mxu0 %v392
        %526 = vmatprep.subr.mxu0 %v389
        %527 = vmatpush1.msra.mxu0 %v388
        %528 = vmatprep.subr.mxu0 %v385
        %529 = vmatpush1.msra.mxu0 %v384
        %530 = vmatprep.subr.mxu0 %v381
        %531 = vmatpush1.msra.mxu0 %v380
        %532 = vmatprep.subr.mxu0 %v377
        %533 = vmatpush1.msra.mxu0 %v376
        %534 = vmatprep.subr.mxu0 %v373
        %535 = vmatpush1.msra.mxu0 %v372
        %536 = vmatprep.subr.mxu0 0.0
        %537 = vmatpush2.msra.mxu0 0.0
        %538 = vmatprep.subr.mxu0 0.0
        %539 = vmatpush2.msra.mxu0 0.0
        %540 = vmatprep.subr.mxu0 0.0
        %541 = vmatpush2.msra.mxu0 0.0
        %542 = vmatprep.subr.mxu0 0.0
        %543 = vmatpush2.msra.mxu0 0.0
        %544 = vmatprep.subr.mxu0 0.0
        %545 = vmatpush2.msra.mxu0 0.0
        %546 = vmatprep.subr.mxu0 0.0
        %547 = vmatpush2.msra.mxu0 0.0
        %548 = vmatprep.subr.mxu0 0.0
        %549 = vmatpush2.msra.mxu0 0.0
        %550 = vmatprep.subr.mxu0 0.0
        %551 = vmatpush2.msra.mxu0 0.0
        %552 = vmatprep.subr.mxu0 0.0
        %553 = vmatpush2.msra.mxu0 0.0
        %554 = vmatprep.subr.mxu0 0.0
        %555 = vmatpush2.msra.mxu0 0.0
        %556 = vmatprep.subr.mxu0 0.0
        %557 = vmatpush2.msra.mxu0 0.0
        %558 = vmatprep.subr.mxu0 0.0
        %559 = vmatpush2.msra.mxu0 0.0
        %560 = vmatprep.subr.mxu0 0.0
        %561 = vmatpush2.msra.mxu0 0.0
        %562 = vmatprep.subr.mxu0 0.0
        %563 = vmatpush2.msra.mxu0 0.0
        %564 = vmatprep.subr.mxu0 0.0
        %565 = vmatpush2.msra.mxu0 0.0
        %566 = vmatprep.subr.mxu0 0.0
        %567 = vmatpush2.msra.mxu0 0.0
        %568 = vmatprep.mubr.f32.mxu0 0.0
        %569 = vmatmul.mubr.f32.gmra.mxu0 %v422
        %v570 = vpop.f32.mrf.mxu0
        %v571 = vadd.f32 %v411, %v570
        %v572 = vpop.f32.mrf.mxu0
        %v573 = vadd.f32 %v415, %v572
        %574 = vmatprep.mubr.f32.mxu0 0.0
        %575 = vmatmul.mubr.f32.gmra.mxu0 %v425
        %v576 = vpop.f32.mrf.mxu0
        %v577 = vadd.f32 %v411, %v576
        %v578 = vpop.f32.mrf.mxu0
        %v579 = vadd.f32 %v415, %v578
        %580 = vdwg.mxu0
        %581 = vst [vmem:[#allocation2] sm:$0xff] %v494
        %582 = vst [vmem:[#allocation2 + $0x8] sm:$0xff] %v496
        %583 = vst [vmem:[#allocation2 + $0x10] sm:$0xff] %v571
        %584 = vst [vmem:[#allocation2 + $0x18] sm:$0xff] %v573
        %585 = vst [vmem:[#allocation2 + $0x20] sm:$0xff] %v500
        %586 = vst [vmem:[#allocation2 + $0x28] sm:$0xff] %v502
        %587 = vst [vmem:[#allocation2 + $0x30] sm:$0xff] %v577
        %588 = vst [vmem:[#allocation2 + $0x38] sm:$0xff] %v579
        %p589 = scmp.eq.s32.totalorder %s26, 0
        %s590 = scalar_select %p589, 0, 7
        %v591 = vld [vmem:[#allocation2] sm:$0x3]
        %v592 = vld [vmem:[#allocation2 + $0x8] sm:$0x3]
        %v593 = vld [vmem:[#allocation2 + $0x10] sm:$0x3]
        %v594 = vld [vmem:[#allocation2 + $0x18] sm:$0x3]
        %v595 = vld [vmem:[%s305] sm:$0xff]
        %v596 = vld [vmem:[%s305 + $0x8] sm:$0xff]
        %v597 = vld [vmem:[%s305 + $0x10] sm:$0xff]
        %v598 = vld [vmem:[%s305 + $0x18] sm:$0xff]
        %v599 = vld [vmem:[%s305 + $0x20] sm:$0xff]
        %v600 = vld [vmem:[%s305 + $0x28] sm:$0xff]
        %v601 = vld [vmem:[%s305 + $0x30] sm:$0xff]
        %v602 = vld [vmem:[%s305 + $0x38] sm:$0xff]
        %v603 = vld [vmem:[%s305 + $0x40] sm:$0xff]
        %v604 = vld [vmem:[%s305 + $0x48] sm:$0xff]
        %v605 = vld [vmem:[%s305 + $0x50] sm:$0xff]
        %v606 = vld [vmem:[%s305 + $0x58] sm:$0xff]
        %v607 = vld [vmem:[%s305 + $0x60] sm:$0xff]
        %v608 = vld [vmem:[%s305 + $0x68] sm:$0xff]
        %v609 = vld [vmem:[%s305 + $0x70] sm:$0xff]
        %v610 = vld [vmem:[%s305 + $0x78] sm:$0xff]
        %v611 = vld [vmem:[%s305 + $0x80] sm:$0xff]
        %v612 = vld [vmem:[%s305 + $0x88] sm:$0xff]
        %v613 = vld [vmem:[%s305 + $0x90] sm:$0xff]
        %v614 = vld [vmem:[%s305 + $0x98] sm:$0xff]
        %v615 = vld [vmem:[%s305 + $0xa0] sm:$0xff]
        %v616 = vld [vmem:[%s305 + $0xa8] sm:$0xff]
        %v617 = vld [vmem:[%s305 + $0xb0] sm:$0xff]
        %v618 = vld [vmem:[%s305 + $0xb8] sm:$0xff]
        %v619 = vld [vmem:[%s305 + $0xc0] sm:$0xff]
        %v620 = vld [vmem:[%s305 + $0xc8] sm:$0xff]
        %v621 = vld [vmem:[%s305 + $0xd0] sm:$0xff]
        %v622 = vld [vmem:[%s305 + $0xd8] sm:$0xff]
        %v623 = vld [vmem:[%s305 + $0xe0] sm:$0xff]
        %v624 = vld [vmem:[%s305 + $0xe8] sm:$0xff]
        %v625 = vld [vmem:[%s305 + $0xf0] sm:$0xff]
        %v626 = vld [vmem:[%s305 + $0xf8] sm:$0xff]
        %v627 = vld [vmem:[%s305 + $0x100] sm:$0xff]
        %v628 = vld [vmem:[%s305 + $0x108] sm:$0xff]
        %v629 = vld [vmem:[%s305 + $0x110] sm:$0xff]
        %v630 = vld [vmem:[%s305 + $0x118] sm:$0xff]
        %v631 = vld [vmem:[%s305 + $0x120] sm:$0xff]
        %v632 = vld [vmem:[%s305 + $0x128] sm:$0xff]
        %v633 = vld [vmem:[%s305 + $0x130] sm:$0xff]
        %v634 = vld [vmem:[%s305 + $0x138] sm:$0xff]
        %v635 = vld [vmem:[%s305 + $0x140] sm:$0xff]
        %v636 = vld [vmem:[%s305 + $0x148] sm:$0xff]
        %v637 = vld [vmem:[%s305 + $0x150] sm:$0xff]
        %v638 = vld [vmem:[%s305 + $0x158] sm:$0xff]
        %v639 = vld [vmem:[%s305 + $0x160] sm:$0xff]
        %v640 = vld [vmem:[%s305 + $0x168] sm:$0xff]
        %v641 = vld [vmem:[%s305 + $0x170] sm:$0xff]
        %v642 = vld [vmem:[%s305 + $0x178] sm:$0xff]
        %v643 = vld [vmem:[%s305 + $0x180] sm:$0xff]
        %v644 = vld [vmem:[%s305 + $0x188] sm:$0xff]
        %v645 = vld [vmem:[%s305 + $0x190] sm:$0xff]
        %v646 = vld [vmem:[%s305 + $0x198] sm:$0xff]
        %v647 = vld [vmem:[%s305 + $0x1a0] sm:$0xff]
        %v648 = vld [vmem:[%s305 + $0x1a8] sm:$0xff]
        %v649 = vld [vmem:[%s305 + $0x1b0] sm:$0xff]
        %v650 = vld [vmem:[%s305 + $0x1b8] sm:$0xff]
        %v651 = vld [vmem:[%s305 + $0x1c0] sm:$0xff]
        %v652 = vld [vmem:[%s305 + $0x1c8] sm:$0xff]
        %v653 = vld [vmem:[%s305 + $0x1d0] sm:$0xff]
        %v654 = vld [vmem:[%s305 + $0x1d8] sm:$0xff]
        %v655 = vld [vmem:[%s305 + $0x1e0] sm:$0xff]
        %v656 = vld [vmem:[%s305 + $0x1e8] sm:$0xff]
        %v657 = vld [vmem:[%s305 + $0x1f0] sm:$0xff]
        %v658 = vld [vmem:[%s305 + $0x1f8] sm:$0xff]
        %659 = vmatprep.subr.mxu0 %v656
        %660 = vmatpush1.msra.mxu0 %v655
        %661 = vmatprep.subr.mxu0 %v652
        %662 = vmatpush1.msra.mxu0 %v651
        %663 = vmatprep.subr.mxu0 %v648
        %664 = vmatpush1.msra.mxu0 %v647
        %665 = vmatprep.subr.mxu0 %v644
        %666 = vmatpush1.msra.mxu0 %v643
        %667 = vmatprep.subr.mxu0 %v640
        %668 = vmatpush1.msra.mxu0 %v639
        %669 = vmatprep.subr.mxu0 %v636
        %670 = vmatpush1.msra.mxu0 %v635
        %671 = vmatprep.subr.mxu0 %v632
        %672 = vmatpush1.msra.mxu0 %v631
        %673 = vmatprep.subr.mxu0 %v628
        %674 = vmatpush1.msra.mxu0 %v627
        %675 = vmatprep.subr.mxu0 %v624
        %676 = vmatpush1.msra.mxu0 %v623
        %677 = vmatprep.subr.mxu0 %v620
        %678 = vmatpush1.msra.mxu0 %v619
        %679 = vmatprep.subr.mxu0 %v616
        %680 = vmatpush1.msra.mxu0 %v615
        %681 = vmatprep.subr.mxu0 %v612
        %682 = vmatpush1.msra.mxu0 %v611
        %683 = vmatprep.subr.mxu0 %v608
        %684 = vmatpush1.msra.mxu0 %v607
        %685 = vmatprep.subr.mxu0 %v604
        %686 = vmatpush1.msra.mxu0 %v603
        %687 = vmatprep.subr.mxu0 %v600
        %688 = vmatpush1.msra.mxu0 %v599
        %689 = vmatprep.subr.mxu0 %v596
        %690 = vmatpush1.msra.mxu0 %v595
        %691 = vmatprep.subr.mxu0 0.0
        %692 = vmatpush2.msra.mxu0 0.0
        %693 = vmatprep.subr.mxu0 0.0
        %694 = vmatpush2.msra.mxu0 0.0
        %695 = vmatprep.subr.mxu0 0.0
        %696 = vmatpush2.msra.mxu0 0.0
        %697 = vmatprep.subr.mxu0 0.0
        %698 = vmatpush2.msra.mxu0 0.0
        %699 = vmatprep.subr.mxu0 0.0
        %700 = vmatpush2.msra.mxu0 0.0
        %701 = vmatprep.subr.mxu0 0.0
        %702 = vmatpush2.msra.mxu0 0.0
        %703 = vmatprep.subr.mxu0 0.0
        %704 = vmatpush2.msra.mxu0 0.0
        %705 = vmatprep.subr.mxu0 0.0
        %706 = vmatpush2.msra.mxu0 0.0
        %707 = vmatprep.subr.mxu0 0.0
        %708 = vmatpush2.msra.mxu0 0.0
        %709 = vmatprep.subr.mxu0 0.0
        %710 = vmatpush2.msra.mxu0 0.0
        %711 = vmatprep.subr.mxu0 0.0
        %712 = vmatpush2.msra.mxu0 0.0
        %713 = vmatprep.subr.mxu0 0.0
        %714 = vmatpush2.msra.mxu0 0.0
        %715 = vmatprep.subr.mxu0 0.0
        %716 = vmatpush2.msra.mxu0 0.0
        %717 = vmatprep.subr.mxu0 0.0
        %718 = vmatpush2.msra.mxu0 0.0
        %719 = vmatprep.subr.mxu0 0.0
        %720 = vmatpush2.msra.mxu0 0.0
        %721 = vmatprep.subr.mxu0 0.0
        %722 = vmatpush2.msra.mxu0 0.0
        %723 = vmatprep.mubr.f32.mxu0 0.0
        %724 = vmatmul.mubr.f32.gmra.mxu0 0.0
        %v725 = vpop.f32.mrf.mxu0
        %v726 = vadd.f32 0.0, %v725
        %v727 = vpop.f32.mrf.mxu0
        %v728 = vadd.f32 0.0, %v727
        %729 = vdwg.mxu0
        %730 = vmatprep.subr.mxu0 %v658
        %731 = vmatpush1.msra.mxu0 %v657
        %732 = vmatprep.subr.mxu0 %v654
        %733 = vmatpush1.msra.mxu0 %v653
        %734 = vmatprep.subr.mxu0 %v650
        %735 = vmatpush1.msra.mxu0 %v649
        %736 = vmatprep.subr.mxu0 %v646
        %737 = vmatpush1.msra.mxu0 %v645
        %738 = vmatprep.subr.mxu0 %v642
        %739 = vmatpush1.msra.mxu0 %v641
        %740 = vmatprep.subr.mxu0 %v638
        %741 = vmatpush1.msra.mxu0 %v637
        %742 = vmatprep.subr.mxu0 %v634
        %743 = vmatpush1.msra.mxu0 %v633
        %744 = vmatprep.subr.mxu0 %v630
        %745 = vmatpush1.msra.mxu0 %v629
        %746 = vmatprep.subr.mxu0 %v626
        %747 = vmatpush1.msra.mxu0 %v625
        %748 = vmatprep.subr.mxu0 %v622
        %749 = vmatpush1.msra.mxu0 %v621
        %750 = vmatprep.subr.mxu0 %v618
        %751 = vmatpush1.msra.mxu0 %v617
        %752 = vmatprep.subr.mxu0 %v614
        %753 = vmatpush1.msra.mxu0 %v613
        %754 = vmatprep.subr.mxu0 %v610
        %755 = vmatpush1.msra.mxu0 %v609
        %756 = vmatprep.subr.mxu0 %v606
        %757 = vmatpush1.msra.mxu0 %v605
        %758 = vmatprep.subr.mxu0 %v602
        %759 = vmatpush1.msra.mxu0 %v601
        %760 = vmatprep.subr.mxu0 %v598
        %761 = vmatpush1.msra.mxu0 %v597
        %762 = vmatprep.subr.mxu0 0.0
        %763 = vmatpush2.msra.mxu0 0.0
        %764 = vmatprep.subr.mxu0 0.0
        %765 = vmatpush2.msra.mxu0 0.0
        %766 = vmatprep.subr.mxu0 0.0
        %767 = vmatpush2.msra.mxu0 0.0
        %768 = vmatprep.subr.mxu0 0.0
        %769 = vmatpush2.msra.mxu0 0.0
        %770 = vmatprep.subr.mxu0 0.0
        %771 = vmatpush2.msra.mxu0 0.0
        %772 = vmatprep.subr.mxu0 0.0
        %773 = vmatpush2.msra.mxu0 0.0
        %774 = vmatprep.subr.mxu0 0.0
        %775 = vmatpush2.msra.mxu0 0.0
        %776 = vmatprep.subr.mxu0 0.0
        %777 = vmatpush2.msra.mxu0 0.0
        %778 = vmatprep.subr.mxu0 0.0
        %779 = vmatpush2.msra.mxu0 0.0
        %780 = vmatprep.subr.mxu0 0.0
        %781 = vmatpush2.msra.mxu0 0.0
        %782 = vmatprep.subr.mxu0 0.0
        %783 = vmatpush2.msra.mxu0 0.0
        %784 = vmatprep.subr.mxu0 0.0
        %785 = vmatpush2.msra.mxu0 0.0
        %786 = vmatprep.subr.mxu0 0.0
        %787 = vmatpush2.msra.mxu0 0.0
        %788 = vmatprep.subr.mxu0 0.0
        %789 = vmatpush2.msra.mxu0 0.0
        %790 = vmatprep.subr.mxu0 0.0
        %791 = vmatpush2.msra.mxu0 0.0
        %792 = vmatprep.subr.mxu0 0.0
        %793 = vmatpush2.msra.mxu0 0.0
        %794 = vmatprep.mubr.f32.mxu0 0.0
        %795 = vmatmul.mubr.f32.gmra.mxu0 0.0
        %v796 = vpop.f32.mrf.mxu0
        %v797 = vadd.f32 0.0, %v796
        %v798 = vpop.f32.mrf.mxu0
        %v799 = vadd.f32 0.0, %v798
        %800 = vdwg.mxu0
        %v801 = vadd.f32 %v591, %v726
        %v802 = vadd.f32 %v592, %v728
        %v803 = vadd.f32 %v593, %v797
        %v804 = vadd.f32 %v594, %v799
        %v805 = vxor.u32 %v801, 2147483648
        %v806 = vmul.f32 %v805, 1.442695
        %v807 = vpow.pop %v806
        %v808 = vadd.f32 %v807, 1.0
        %v809 = vrcp.pop %v808
        %v810 = vmul.f32 1.0, %v809
        %v811 = vxor.u32 %v802, 2147483648
        %v812 = vmul.f32 %v811, 1.442695
        %v813 = vpow.pop %v812
        %v814 = vadd.f32 %v813, 1.0
        %v815 = vrcp.pop %v814
        %v816 = vmul.f32 1.0, %v815
        %v817 = vtanh.pop %v803
        %v818 = vxor.u32 %v804, 2147483648
        %v819 = vmul.f32 %v818, 1.442695
        %v820 = vpow.pop %v819
        %v821 = vadd.f32 %v820, 1.0
        %v822 = vrcp.pop %v821
        %v823 = vmul.f32 1.0, %v822
        %v824 = vmul.f32 %v816, 0.0
        %v825 = vmul.f32 %v810, %v817
        %v826 = vadd.f32 %v824, %v825
        %v827 = vtanh.pop %v826
        %v828 = vmul.f32 %v823, %v827
        %v829 = vstv %s590
        %vm830 = vcmp.lt.s32.totalorder %v829, %v367
        %v831 = vsel %vm830, 1, 0
        %832 = vset.pattern.permute.xlu0 0
        %833 = vperm.xlu0 %832, %v831
        %v834 = vpop.permute.xlu0 %833
        %vm835 = vcmp.eq.s32.totalorder %v834, 1
        %v836 = vsel %vm835, %v828, 0.0
        %v837 = vsel %vm835, %v826, 0.0
        %s838 = scalar_select %p589, 1, 6
        %v839 = vld [vmem:[#allocation2] sm:$0xc]
        %v840 = vld [vmem:[#allocation2 + $0x8] sm:$0xc]
        %v841 = vld [vmem:[#allocation2 + $0x10] sm:$0xc]
        %v842 = vld [vmem:[#allocation2 + $0x18] sm:$0xc]
        %843 = vmatprep.subr.mxu0 %v656
        %844 = vmatpush1.msra.mxu0 %v655
        %845 = vmatprep.subr.mxu0 %v652
        %846 = vmatpush1.msra.mxu0 %v651
        %847 = vmatprep.subr.mxu0 %v648
        %848 = vmatpush1.msra.mxu0 %v647
        %849 = vmatprep.subr.mxu0 %v644
        %850 = vmatpush1.msra.mxu0 %v643
        %851 = vmatprep.subr.mxu0 %v640
        %852 = vmatpush1.msra.mxu0 %v639
        %853 = vmatprep.subr.mxu0 %v636
        %854 = vmatpush1.msra.mxu0 %v635
        %855 = vmatprep.subr.mxu0 %v632
        %856 = vmatpush1.msra.mxu0 %v631
        %857 = vmatprep.subr.mxu0 %v628
        %858 = vmatpush1.msra.mxu0 %v627
        %859 = vmatprep.subr.mxu0 %v624
        %860 = vmatpush1.msra.mxu0 %v623
        %861 = vmatprep.subr.mxu0 %v620
        %862 = vmatpush1.msra.mxu0 %v619
        %863 = vmatprep.subr.mxu0 %v616
        %864 = vmatpush1.msra.mxu0 %v615
        %865 = vmatprep.subr.mxu0 %v612
        %866 = vmatpush1.msra.mxu0 %v611
        %867 = vmatprep.subr.mxu0 %v608
        %868 = vmatpush1.msra.mxu0 %v607
        %869 = vmatprep.subr.mxu0 %v604
        %870 = vmatpush1.msra.mxu0 %v603
        %871 = vmatprep.subr.mxu0 %v600
        %872 = vmatpush1.msra.mxu0 %v599
        %873 = vmatprep.subr.mxu0 %v596
        %874 = vmatpush1.msra.mxu0 %v595
        %875 = vmatprep.subr.mxu0 0.0
        %876 = vmatpush2.msra.mxu0 0.0
        %877 = vmatprep.subr.mxu0 0.0
        %878 = vmatpush2.msra.mxu0 0.0
        %879 = vmatprep.subr.mxu0 0.0
        %880 = vmatpush2.msra.mxu0 0.0
        %881 = vmatprep.subr.mxu0 0.0
        %882 = vmatpush2.msra.mxu0 0.0
        %883 = vmatprep.subr.mxu0 0.0
        %884 = vmatpush2.msra.mxu0 0.0
        %885 = vmatprep.subr.mxu0 0.0
        %886 = vmatpush2.msra.mxu0 0.0
        %887 = vmatprep.subr.mxu0 0.0
        %888 = vmatpush2.msra.mxu0 0.0
        %889 = vmatprep.subr.mxu0 0.0
        %890 = vmatpush2.msra.mxu0 0.0
        %891 = vmatprep.subr.mxu0 0.0
        %892 = vmatpush2.msra.mxu0 0.0
        %893 = vmatprep.subr.mxu0 0.0
        %894 = vmatpush2.msra.mxu0 0.0
        %895 = vmatprep.subr.mxu0 0.0
        %896 = vmatpush2.msra.mxu0 0.0
        %897 = vmatprep.subr.mxu0 0.0
        %898 = vmatpush2.msra.mxu0 0.0
        %899 = vmatprep.subr.mxu0 0.0
        %900 = vmatpush2.msra.mxu0 0.0
        %901 = vmatprep.subr.mxu0 0.0
        %902 = vmatpush2.msra.mxu0 0.0
        %903 = vmatprep.subr.mxu0 0.0
        %904 = vmatpush2.msra.mxu0 0.0
        %905 = vmatprep.subr.mxu0 0.0
        %906 = vmatpush2.msra.mxu0 0.0
        %907 = vmatprep.mubr.f32.mxu0 0.0
        %908 = vmatmul.mubr.f32.gmra.mxu0 %v836
        %v909 = vpop.f32.mrf.mxu0
        %v910 = vadd.f32 0.0, %v909
        %v911 = vpop.f32.mrf.mxu0
        %v912 = vadd.f32 0.0, %v911
        %913 = vdwg.mxu0
        %914 = vmatprep.subr.mxu0 %v658
        %915 = vmatpush1.msra.mxu0 %v657
        %916 = vmatprep.subr.mxu0 %v654
        %917 = vmatpush1.msra.mxu0 %v653
        %918 = vmatprep.subr.mxu0 %v650
        %919 = vmatpush1.msra.mxu0 %v649
        %920 = vmatprep.subr.mxu0 %v646
        %921 = vmatpush1.msra.mxu0 %v645
        %922 = vmatprep.subr.mxu0 %v642
        %923 = vmatpush1.msra.mxu0 %v641
        %924 = vmatprep.subr.mxu0 %v638
        %925 = vmatpush1.msra.mxu0 %v637
        %926 = vmatprep.subr.mxu0 %v634
        %927 = vmatpush1.msra.mxu0 %v633
        %928 = vmatprep.subr.mxu0 %v630
        %929 = vmatpush1.msra.mxu0 %v629
        %930 = vmatprep.subr.mxu0 %v626
        %931 = vmatpush1.msra.mxu0 %v625
        %932 = vmatprep.subr.mxu0 %v622
        %933 = vmatpush1.msra.mxu0 %v621
        %934 = vmatprep.subr.mxu0 %v618
        %935 = vmatpush1.msra.mxu0 %v617
        %936 = vmatprep.subr.mxu0 %v614
        %937 = vmatpush1.msra.mxu0 %v613
        %938 = vmatprep.subr.mxu0 %v610
        %939 = vmatpush1.msra.mxu0 %v609
        %940 = vmatprep.subr.mxu0 %v606
        %941 = vmatpush1.msra.mxu0 %v605
        %942 = vmatprep.subr.mxu0 %v602
        %943 = vmatpush1.msra.mxu0 %v601
        %944 = vmatprep.subr.mxu0 %v598
        %945 = vmatpush1.msra.mxu0 %v597
        %946 = vmatprep.subr.mxu0 0.0
        %947 = vmatpush2.msra.mxu0 0.0
        %948 = vmatprep.subr.mxu0 0.0
        %949 = vmatpush2.msra.mxu0 0.0
        %950 = vmatprep.subr.mxu0 0.0
        %951 = vmatpush2.msra.mxu0 0.0
        %952 = vmatprep.subr.mxu0 0.0
        %953 = vmatpush2.msra.mxu0 0.0
        %954 = vmatprep.subr.mxu0 0.0
        %955 = vmatpush2.msra.mxu0 0.0
        %956 = vmatprep.subr.mxu0 0.0
        %957 = vmatpush2.msra.mxu0 0.0
        %958 = vmatprep.subr.mxu0 0.0
        %959 = vmatpush2.msra.mxu0 0.0
        %960 = vmatprep.subr.mxu0 0.0
        %961 = vmatpush2.msra.mxu0 0.0
        %962 = vmatprep.subr.mxu0 0.0
        %963 = vmatpush2.msra.mxu0 0.0
        %964 = vmatprep.subr.mxu0 0.0
        %965 = vmatpush2.msra.mxu0 0.0
        %966 = vmatprep.subr.mxu0 0.0
        %967 = vmatpush2.msra.mxu0 0.0
        %968 = vmatprep.subr.mxu0 0.0
        %969 = vmatpush2.msra.mxu0 0.0
        %970 = vmatprep.subr.mxu0 0.0
        %971 = vmatpush2.msra.mxu0 0.0
        %972 = vmatprep.subr.mxu0 0.0
        %973 = vmatpush2.msra.mxu0 0.0
        %974 = vmatprep.subr.mxu0 0.0
        %975 = vmatpush2.msra.mxu0 0.0
        %976 = vmatprep.subr.mxu0 0.0
        %977 = vmatpush2.msra.mxu0 0.0
        %978 = vmatprep.mubr.f32.mxu0 0.0
        %979 = vmatmul.mubr.f32.gmra.mxu0 %v836
        %v980 = vpop.f32.mrf.mxu0
        %v981 = vadd.f32 0.0, %v980
        %v982 = vpop.f32.mrf.mxu0
        %v983 = vadd.f32 0.0, %v982
        %984 = vdwg.mxu0
        %v989 = vrot.slane %v910, 6
        %v990 = vrot.slane %v912, 6
        %v991 = vrot.slane %v981, 6
        %v992 = vrot.slane %v983, 6
        %v997 = vadd.f32 %v839, %v989
        %v998 = vadd.f32 %v840, %v990
        %v999 = vadd.f32 %v841, %v991
        %v1000 = vadd.f32 %v842, %v992
        %v1001 = vxor.u32 %v997, 2147483648
        %v1002 = vmul.f32 %v1001, 1.442695
        %v1003 = vpow.pop %v1002
        %v1004 = vadd.f32 %v1003, 1.0
        %v1005 = vrcp.pop %v1004
        %v1006 = vmul.f32 1.0, %v1005
        %v1007 = vxor.u32 %v998, 2147483648
        %v1008 = vmul.f32 %v1007, 1.442695
        %v1009 = vpow.pop %v1008
        %v1010 = vadd.f32 %v1009, 1.0
        %v1011 = vrcp.pop %v1010
        %v1012 = vmul.f32 1.0, %v1011
        %v1013 = vtanh.pop %v999
        %v1014 = vxor.u32 %v1000, 2147483648
        %v1015 = vmul.f32 %v1014, 1.442695
        %v1016 = vpow.pop %v1015
        %v1017 = vadd.f32 %v1016, 1.0
        %v1018 = vrcp.pop %v1017
        %v1019 = vmul.f32 1.0, %v1018
        %v1021 = vrot.slane %v837, 6
        %v1023 = vmul.f32 %v1012, %v1021
        %v1024 = vmul.f32 %v1006, %v1013
        %v1025 = vadd.f32 %v1023, %v1024
        %v1026 = vtanh.pop %v1025
        %v1027 = vmul.f32 %v1019, %v1026
        %v1028 = vstv %s838
        %vm1029 = vcmp.lt.s32.totalorder %v1028, %v367
        %v1030 = vsel %vm1029, 1, 0
        %1031 = vset.pattern.permute.xlu0 0
        %1032 = vperm.xlu0 %1031, %v1030
        %v1033 = vpop.permute.xlu0 %1032
        %vm1034 = vcmp.eq.s32.totalorder %v1033, 1
        %v1036 = vrot.slane %v1027, 2
        %v1038 = vsel %vm1034, %v1036, %v836
        %v1040 = vrot.slane %v1025, 2
        %v1042 = vsel %vm1034, %v1040, %v837
        %s1043 = scalar_select %p589, 2, 5
        %v1044 = vld [vmem:[#allocation2] sm:$0x30]
        %v1045 = vld [vmem:[#allocation2 + $0x8] sm:$0x30]
        %v1046 = vld [vmem:[#allocation2 + $0x10] sm:$0x30]
        %v1047 = vld [vmem:[#allocation2 + $0x18] sm:$0x30]
        %1048 = vmatprep.subr.mxu0 %v656
        %1049 = vmatpush1.msra.mxu0 %v655
        %1050 = vmatprep.subr.mxu0 %v652
        %1051 = vmatpush1.msra.mxu0 %v651
        %1052 = vmatprep.subr.mxu0 %v648
        %1053 = vmatpush1.msra.mxu0 %v647
        %1054 = vmatprep.subr.mxu0 %v644
        %1055 = vmatpush1.msra.mxu0 %v643
        %1056 = vmatprep.subr.mxu0 %v640
        %1057 = vmatpush1.msra.mxu0 %v639
        %1058 = vmatprep.subr.mxu0 %v636
        %1059 = vmatpush1.msra.mxu0 %v635
        %1060 = vmatprep.subr.mxu0 %v632
        %1061 = vmatpush1.msra.mxu0 %v631
        %1062 = vmatprep.subr.mxu0 %v628
        %1063 = vmatpush1.msra.mxu0 %v627
        %1064 = vmatprep.subr.mxu0 %v624
        %1065 = vmatpush1.msra.mxu0 %v623
        %1066 = vmatprep.subr.mxu0 %v620
        %1067 = vmatpush1.msra.mxu0 %v619
        %1068 = vmatprep.subr.mxu0 %v616
        %1069 = vmatpush1.msra.mxu0 %v615
        %1070 = vmatprep.subr.mxu0 %v612
        %1071 = vmatpush1.msra.mxu0 %v611
        %1072 = vmatprep.subr.mxu0 %v608
        %1073 = vmatpush1.msra.mxu0 %v607
        %1074 = vmatprep.subr.mxu0 %v604
        %1075 = vmatpush1.msra.mxu0 %v603
        %1076 = vmatprep.subr.mxu0 %v600
        %1077 = vmatpush1.msra.mxu0 %v599
        %1078 = vmatprep.subr.mxu0 %v596
        %1079 = vmatpush1.msra.mxu0 %v595
        %1080 = vmatprep.subr.mxu0 0.0
        %1081 = vmatpush2.msra.mxu0 0.0
        %1082 = vmatprep.subr.mxu0 0.0
        %1083 = vmatpush2.msra.mxu0 0.0
        %1084 = vmatprep.subr.mxu0 0.0
        %1085 = vmatpush2.msra.mxu0 0.0
        %1086 = vmatprep.subr.mxu0 0.0
        %1087 = vmatpush2.msra.mxu0 0.0
        %1088 = vmatprep.subr.mxu0 0.0
        %1089 = vmatpush2.msra.mxu0 0.0
        %1090 = vmatprep.subr.mxu0 0.0
        %1091 = vmatpush2.msra.mxu0 0.0
        %1092 = vmatprep.subr.mxu0 0.0
        %1093 = vmatpush2.msra.mxu0 0.0
        %1094 = vmatprep.subr.mxu0 0.0
        %1095 = vmatpush2.msra.mxu0 0.0
        %1096 = vmatprep.subr.mxu0 0.0
        %1097 = vmatpush2.msra.mxu0 0.0
        %1098 = vmatprep.subr.mxu0 0.0
        %1099 = vmatpush2.msra.mxu0 0.0
        %1100 = vmatprep.subr.mxu0 0.0
        %1101 = vmatpush2.msra.mxu0 0.0
        %1102 = vmatprep.subr.mxu0 0.0
        %1103 = vmatpush2.msra.mxu0 0.0
        %1104 = vmatprep.subr.mxu0 0.0
        %1105 = vmatpush2.msra.mxu0 0.0
        %1106 = vmatprep.subr.mxu0 0.0
        %1107 = vmatpush2.msra.mxu0 0.0
        %1108 = vmatprep.subr.mxu0 0.0
        %1109 = vmatpush2.msra.mxu0 0.0
        %1110 = vmatprep.subr.mxu0 0.0
        %1111 = vmatpush2.msra.mxu0 0.0
        %1112 = vmatprep.mubr.f32.mxu0 0.0
        %1113 = vmatmul.mubr.f32.gmra.mxu0 %v1038
        %v1114 = vpop.f32.mrf.mxu0
        %v1115 = vadd.f32 0.0, %v1114
        %v1116 = vpop.f32.mrf.mxu0
        %v1117 = vadd.f32 0.0, %v1116
        %1118 = vdwg.mxu0
        %1119 = vmatprep.subr.mxu0 %v658
        %1120 = vmatpush1.msra.mxu0 %v657
        %1121 = vmatprep.subr.mxu0 %v654
        %1122 = vmatpush1.msra.mxu0 %v653
        %1123 = vmatprep.subr.mxu0 %v650
        %1124 = vmatpush1.msra.mxu0 %v649
        %1125 = vmatprep.subr.mxu0 %v646
        %1126 = vmatpush1.msra.mxu0 %v645
        %1127 = vmatprep.subr.mxu0 %v642
        %1128 = vmatpush1.msra.mxu0 %v641
        %1129 = vmatprep.subr.mxu0 %v638
        %1130 = vmatpush1.msra.mxu0 %v637
        %1131 = vmatprep.subr.mxu0 %v634
        %1132 = vmatpush1.msra.mxu0 %v633
        %1133 = vmatprep.subr.mxu0 %v630
        %1134 = vmatpush1.msra.mxu0 %v629
        %1135 = vmatprep.subr.mxu0 %v626
        %1136 = vmatpush1.msra.mxu0 %v625
        %1137 = vmatprep.subr.mxu0 %v622
        %1138 = vmatpush1.msra.mxu0 %v621
        %1139 = vmatprep.subr.mxu0 %v618
        %1140 = vmatpush1.msra.mxu0 %v617
        %1141 = vmatprep.subr.mxu0 %v614
        %1142 = vmatpush1.msra.mxu0 %v613
        %1143 = vmatprep.subr.mxu0 %v610
        %1144 = vmatpush1.msra.mxu0 %v609
        %1145 = vmatprep.subr.mxu0 %v606
        %1146 = vmatpush1.msra.mxu0 %v605
        %1147 = vmatprep.subr.mxu0 %v602
        %1148 = vmatpush1.msra.mxu0 %v601
        %1149 = vmatprep.subr.mxu0 %v598
        %1150 = vmatpush1.msra.mxu0 %v597
        %1151 = vmatprep.subr.mxu0 0.0
        %1152 = vmatpush2.msra.mxu0 0.0
        %1153 = vmatprep.subr.mxu0 0.0
        %1154 = vmatpush2.msra.mxu0 0.0
        %1155 = vmatprep.subr.mxu0 0.0
        %1156 = vmatpush2.msra.mxu0 0.0
        %1157 = vmatprep.subr.mxu0 0.0
        %1158 = vmatpush2.msra.mxu0 0.0
        %1159 = vmatprep.subr.mxu0 0.0
        %1160 = vmatpush2.msra.mxu0 0.0
        %1161 = vmatprep.subr.mxu0 0.0
        %1162 = vmatpush2.msra.mxu0 0.0
        %1163 = vmatprep.subr.mxu0 0.0
        %1164 = vmatpush2.msra.mxu0 0.0
        %1165 = vmatprep.subr.mxu0 0.0
        %1166 = vmatpush2.msra.mxu0 0.0
        %1167 = vmatprep.subr.mxu0 0.0
        %1168 = vmatpush2.msra.mxu0 0.0
        %1169 = vmatprep.subr.mxu0 0.0
        %1170 = vmatpush2.msra.mxu0 0.0
        %1171 = vmatprep.subr.mxu0 0.0
        %1172 = vmatpush2.msra.mxu0 0.0
        %1173 = vmatprep.subr.mxu0 0.0
        %1174 = vmatpush2.msra.mxu0 0.0
        %1175 = vmatprep.subr.mxu0 0.0
        %1176 = vmatpush2.msra.mxu0 0.0
        %1177 = vmatprep.subr.mxu0 0.0
        %1178 = vmatpush2.msra.mxu0 0.0
        %1179 = vmatprep.subr.mxu0 0.0
        %1180 = vmatpush2.msra.mxu0 0.0
        %1181 = vmatprep.subr.mxu0 0.0
        %1182 = vmatpush2.msra.mxu0 0.0
        %1183 = vmatprep.mubr.f32.mxu0 0.0
        %1184 = vmatmul.mubr.f32.gmra.mxu0 %v1038
        %v1185 = vpop.f32.mrf.mxu0
        %v1186 = vadd.f32 0.0, %v1185
        %v1187 = vpop.f32.mrf.mxu0
        %v1188 = vadd.f32 0.0, %v1187
        %1189 = vdwg.mxu0
        %v1194 = vrot.slane %v1115, 4
        %v1195 = vrot.slane %v1117, 4
        %v1196 = vrot.slane %v1186, 4
        %v1197 = vrot.slane %v1188, 4
        %v1202 = vadd.f32 %v1044, %v1194
        %v1203 = vadd.f32 %v1045, %v1195
        %v1204 = vadd.f32 %v1046, %v1196
        %v1205 = vadd.f32 %v1047, %v1197
        %v1206 = vxor.u32 %v1202, 2147483648
        %v1207 = vmul.f32 %v1206, 1.442695
        %v1208 = vpow.pop %v1207
        %v1209 = vadd.f32 %v1208, 1.0
        %v1210 = vrcp.pop %v1209
        %v1211 = vmul.f32 1.0, %v1210
        %v1212 = vxor.u32 %v1203, 2147483648
        %v1213 = vmul.f32 %v1212, 1.442695
        %v1214 = vpow.pop %v1213
        %v1215 = vadd.f32 %v1214, 1.0
        %v1216 = vrcp.pop %v1215
        %v1217 = vmul.f32 1.0, %v1216
        %v1218 = vtanh.pop %v1204
        %v1219 = vxor.u32 %v1205, 2147483648
        %v1220 = vmul.f32 %v1219, 1.442695
        %v1221 = vpow.pop %v1220
        %v1222 = vadd.f32 %v1221, 1.0
        %v1223 = vrcp.pop %v1222
        %v1224 = vmul.f32 1.0, %v1223
        %v1226 = vrot.slane %v1042, 4
        %v1228 = vmul.f32 %v1217, %v1226
        %v1229 = vmul.f32 %v1211, %v1218
        %v1230 = vadd.f32 %v1228, %v1229
        %v1231 = vtanh.pop %v1230
        %v1232 = vmul.f32 %v1224, %v1231
        %v1233 = vstv %s1043
        %vm1234 = vcmp.lt.s32.totalorder %v1233, %v367
        %v1235 = vsel %vm1234, 1, 0
        %1236 = vset.pattern.permute.xlu0 0
        %1237 = vperm.xlu0 %1236, %v1235
        %v1238 = vpop.permute.xlu0 %1237
        %vm1239 = vcmp.eq.s32.totalorder %v1238, 1
        %v1241 = vrot.slane %v1232, 4
        %v1243 = vsel %vm1239, %v1241, %v1038
        %v1245 = vrot.slane %v1230, 4
        %v1247 = vsel %vm1239, %v1245, %v1042
        %s1248 = scalar_select %p589, 3, 4
        %v1249 = vld [vmem:[#allocation2] sm:$0xc0]
        %v1250 = vld [vmem:[#allocation2 + $0x8] sm:$0xc0]
        %v1251 = vld [vmem:[#allocation2 + $0x10] sm:$0xc0]
        %v1252 = vld [vmem:[#allocation2 + $0x18] sm:$0xc0]
        %1253 = vmatprep.subr.mxu0 %v656
        %1254 = vmatpush1.msra.mxu0 %v655
        %1255 = vmatprep.subr.mxu0 %v652
        %1256 = vmatpush1.msra.mxu0 %v651
        %1257 = vmatprep.subr.mxu0 %v648
        %1258 = vmatpush1.msra.mxu0 %v647
        %1259 = vmatprep.subr.mxu0 %v644
        %1260 = vmatpush1.msra.mxu0 %v643
        %1261 = vmatprep.subr.mxu0 %v640
        %1262 = vmatpush1.msra.mxu0 %v639
        %1263 = vmatprep.subr.mxu0 %v636
        %1264 = vmatpush1.msra.mxu0 %v635
        %1265 = vmatprep.subr.mxu0 %v632
        %1266 = vmatpush1.msra.mxu0 %v631
        %1267 = vmatprep.subr.mxu0 %v628
        %1268 = vmatpush1.msra.mxu0 %v627
        %1269 = vmatprep.subr.mxu0 %v624
        %1270 = vmatpush1.msra.mxu0 %v623
        %1271 = vmatprep.subr.mxu0 %v620
        %1272 = vmatpush1.msra.mxu0 %v619
        %1273 = vmatprep.subr.mxu0 %v616
        %1274 = vmatpush1.msra.mxu0 %v615
        %1275 = vmatprep.subr.mxu0 %v612
        %1276 = vmatpush1.msra.mxu0 %v611
        %1277 = vmatprep.subr.mxu0 %v608
        %1278 = vmatpush1.msra.mxu0 %v607
        %1279 = vmatprep.subr.mxu0 %v604
        %1280 = vmatpush1.msra.mxu0 %v603
        %1281 = vmatprep.subr.mxu0 %v600
        %1282 = vmatpush1.msra.mxu0 %v599
        %1283 = vmatprep.subr.mxu0 %v596
        %1284 = vmatpush1.msra.mxu0 %v595
        %1285 = vmatprep.subr.mxu0 0.0
        %1286 = vmatpush2.msra.mxu0 0.0
        %1287 = vmatprep.subr.mxu0 0.0
        %1288 = vmatpush2.msra.mxu0 0.0
        %1289 = vmatprep.subr.mxu0 0.0
        %1290 = vmatpush2.msra.mxu0 0.0
        %1291 = vmatprep.subr.mxu0 0.0
        %1292 = vmatpush2.msra.mxu0 0.0
        %1293 = vmatprep.subr.mxu0 0.0
        %1294 = vmatpush2.msra.mxu0 0.0
        %1295 = vmatprep.subr.mxu0 0.0
        %1296 = vmatpush2.msra.mxu0 0.0
        %1297 = vmatprep.subr.mxu0 0.0
        %1298 = vmatpush2.msra.mxu0 0.0
        %1299 = vmatprep.subr.mxu0 0.0
        %1300 = vmatpush2.msra.mxu0 0.0
        %1301 = vmatprep.subr.mxu0 0.0
        %1302 = vmatpush2.msra.mxu0 0.0
        %1303 = vmatprep.subr.mxu0 0.0
        %1304 = vmatpush2.msra.mxu0 0.0
        %1305 = vmatprep.subr.mxu0 0.0
        %1306 = vmatpush2.msra.mxu0 0.0
        %1307 = vmatprep.subr.mxu0 0.0
        %1308 = vmatpush2.msra.mxu0 0.0
        %1309 = vmatprep.subr.mxu0 0.0
        %1310 = vmatpush2.msra.mxu0 0.0
        %1311 = vmatprep.subr.mxu0 0.0
        %1312 = vmatpush2.msra.mxu0 0.0
        %1313 = vmatprep.subr.mxu0 0.0
        %1314 = vmatpush2.msra.mxu0 0.0
        %1315 = vmatprep.subr.mxu0 0.0
        %1316 = vmatpush2.msra.mxu0 0.0
        %1317 = vmatprep.mubr.f32.mxu0 0.0
        %1318 = vmatmul.mubr.f32.gmra.mxu0 %v1243
        %v1319 = vpop.f32.mrf.mxu0
        %v1320 = vadd.f32 0.0, %v1319
        %v1321 = vpop.f32.mrf.mxu0
        %v1322 = vadd.f32 0.0, %v1321
        %1323 = vdwg.mxu0
        %1324 = vmatprep.subr.mxu0 %v658
        %1325 = vmatpush1.msra.mxu0 %v657
        %1326 = vmatprep.subr.mxu0 %v654
        %1327 = vmatpush1.msra.mxu0 %v653
        %1328 = vmatprep.subr.mxu0 %v650
        %1329 = vmatpush1.msra.mxu0 %v649
        %1330 = vmatprep.subr.mxu0 %v646
        %1331 = vmatpush1.msra.mxu0 %v645
        %1332 = vmatprep.subr.mxu0 %v642
        %1333 = vmatpush1.msra.mxu0 %v641
        %1334 = vmatprep.subr.mxu0 %v638
        %1335 = vmatpush1.msra.mxu0 %v637
        %1336 = vmatprep.subr.mxu0 %v634
        %1337 = vmatpush1.msra.mxu0 %v633
        %1338 = vmatprep.subr.mxu0 %v630
        %1339 = vmatpush1.msra.mxu0 %v629
        %1340 = vmatprep.subr.mxu0 %v626
        %1341 = vmatpush1.msra.mxu0 %v625
        %1342 = vmatprep.subr.mxu0 %v622
        %1343 = vmatpush1.msra.mxu0 %v621
        %1344 = vmatprep.subr.mxu0 %v618
        %1345 = vmatpush1.msra.mxu0 %v617
        %1346 = vmatprep.subr.mxu0 %v614
        %1347 = vmatpush1.msra.mxu0 %v613
        %1348 = vmatprep.subr.mxu0 %v610
        %1349 = vmatpush1.msra.mxu0 %v609
        %1350 = vmatprep.subr.mxu0 %v606
        %1351 = vmatpush1.msra.mxu0 %v605
        %1352 = vmatprep.subr.mxu0 %v602
        %1353 = vmatpush1.msra.mxu0 %v601
        %1354 = vmatprep.subr.mxu0 %v598
        %1355 = vmatpush1.msra.mxu0 %v597
        %1356 = vmatprep.subr.mxu0 0.0
        %1357 = vmatpush2.msra.mxu0 0.0
        %1358 = vmatprep.subr.mxu0 0.0
        %1359 = vmatpush2.msra.mxu0 0.0
        %1360 = vmatprep.subr.mxu0 0.0
        %1361 = vmatpush2.msra.mxu0 0.0
        %1362 = vmatprep.subr.mxu0 0.0
        %1363 = vmatpush2.msra.mxu0 0.0
        %1364 = vmatprep.subr.mxu0 0.0
        %1365 = vmatpush2.msra.mxu0 0.0
        %1366 = vmatprep.subr.mxu0 0.0
        %1367 = vmatpush2.msra.mxu0 0.0
        %1368 = vmatprep.subr.mxu0 0.0
        %1369 = vmatpush2.msra.mxu0 0.0
        %1370 = vmatprep.subr.mxu0 0.0
        %1371 = vmatpush2.msra.mxu0 0.0
        %1372 = vmatprep.subr.mxu0 0.0
        %1373 = vmatpush2.msra.mxu0 0.0
        %1374 = vmatprep.subr.mxu0 0.0
        %1375 = vmatpush2.msra.mxu0 0.0
        %1376 = vmatprep.subr.mxu0 0.0
        %1377 = vmatpush2.msra.mxu0 0.0
        %1378 = vmatprep.subr.mxu0 0.0
        %1379 = vmatpush2.msra.mxu0 0.0
        %1380 = vmatprep.subr.mxu0 0.0
        %1381 = vmatpush2.msra.mxu0 0.0
        %1382 = vmatprep.subr.mxu0 0.0
        %1383 = vmatpush2.msra.mxu0 0.0
        %1384 = vmatprep.subr.mxu0 0.0
        %1385 = vmatpush2.msra.mxu0 0.0
        %1386 = vmatprep.subr.mxu0 0.0
        %1387 = vmatpush2.msra.mxu0 0.0
        %1388 = vmatprep.mubr.f32.mxu0 0.0
        %1389 = vmatmul.mubr.f32.gmra.mxu0 %v1243
        %v1390 = vpop.f32.mrf.mxu0
        %v1391 = vadd.f32 0.0, %v1390
        %v1392 = vpop.f32.mrf.mxu0
        %v1393 = vadd.f32 0.0, %v1392
        %1394 = vdwg.mxu0
        %v1399 = vrot.slane %v1320, 2
        %v1400 = vrot.slane %v1322, 2
        %v1401 = vrot.slane %v1391, 2
        %v1402 = vrot.slane %v1393, 2
        %v1407 = vadd.f32 %v1249, %v1399
        %v1408 = vadd.f32 %v1250, %v1400
        %v1409 = vadd.f32 %v1251, %v1401
        %v1410 = vadd.f32 %v1252, %v1402
        %v1411 = vxor.u32 %v1407, 2147483648
        %v1412 = vmul.f32 %v1411, 1.442695
        %v1413 = vpow.pop %v1412
        %v1414 = vadd.f32 %v1413, 1.0
        %v1415 = vrcp.pop %v1414
        %v1416 = vmul.f32 1.0, %v1415
        %v1417 = vxor.u32 %v1408, 2147483648
        %v1418 = vmul.f32 %v1417, 1.442695
        %v1419 = vpow.pop %v1418
        %v1420 = vadd.f32 %v1419, 1.0
        %v1421 = vrcp.pop %v1420
        %v1422 = vmul.f32 1.0, %v1421
        %v1423 = vtanh.pop %v1409
        %v1424 = vxor.u32 %v1410, 2147483648
        %v1425 = vmul.f32 %v1424, 1.442695
        %v1426 = vpow.pop %v1425
        %v1427 = vadd.f32 %v1426, 1.0
        %v1428 = vrcp.pop %v1427
        %v1429 = vmul.f32 1.0, %v1428
        %v1431 = vrot.slane %v1247, 2
        %v1433 = vmul.f32 %v1422, %v1431
        %v1434 = vmul.f32 %v1416, %v1423
        %v1435 = vadd.f32 %v1433, %v1434
        %v1436 = vtanh.pop %v1435
        %v1437 = vmul.f32 %v1429, %v1436
        %v1438 = vstv %s1248
        %vm1439 = vcmp.lt.s32.totalorder %v1438, %v367
        %v1440 = vsel %vm1439, 1, 0
        %1441 = vset.pattern.permute.xlu0 0
        %1442 = vperm.xlu0 %1441, %v1440
        %v1443 = vpop.permute.xlu0 %1442
        %vm1444 = vcmp.eq.s32.totalorder %v1443, 1
        %v1446 = vrot.slane %v1437, 6
        %v1448 = vsel %vm1444, %v1446, %v1243
        %v1450 = vrot.slane %v1435, 6
        %v1452 = vsel %vm1444, %v1450, %v1247
        %s1453 = scalar_select %p589, 4, 3
        %v1454 = vld [vmem:[#allocation2 + $0x20] sm:$0x3]
        %v1455 = vld [vmem:[#allocation2 + $0x28] sm:$0x3]
        %v1456 = vld [vmem:[#allocation2 + $0x30] sm:$0x3]
        %v1457 = vld [vmem:[#allocation2 + $0x38] sm:$0x3]
        %1458 = vmatprep.subr.mxu0 %v656
        %1459 = vmatpush1.msra.mxu0 %v655
        %1460 = vmatprep.subr.mxu0 %v652
        %1461 = vmatpush1.msra.mxu0 %v651
        %1462 = vmatprep.subr.mxu0 %v648
        %1463 = vmatpush1.msra.mxu0 %v647
        %1464 = vmatprep.subr.mxu0 %v644
        %1465 = vmatpush1.msra.mxu0 %v643
        %1466 = vmatprep.subr.mxu0 %v640
        %1467 = vmatpush1.msra.mxu0 %v639
        %1468 = vmatprep.subr.mxu0 %v636
        %1469 = vmatpush1.msra.mxu0 %v635
        %1470 = vmatprep.subr.mxu0 %v632
        %1471 = vmatpush1.msra.mxu0 %v631
        %1472 = vmatprep.subr.mxu0 %v628
        %1473 = vmatpush1.msra.mxu0 %v627
        %1474 = vmatprep.subr.mxu0 %v624
        %1475 = vmatpush1.msra.mxu0 %v623
        %1476 = vmatprep.subr.mxu0 %v620
        %1477 = vmatpush1.msra.mxu0 %v619
        %1478 = vmatprep.subr.mxu0 %v616
        %1479 = vmatpush1.msra.mxu0 %v615
        %1480 = vmatprep.subr.mxu0 %v612
        %1481 = vmatpush1.msra.mxu0 %v611
        %1482 = vmatprep.subr.mxu0 %v608
        %1483 = vmatpush1.msra.mxu0 %v607
        %1484 = vmatprep.subr.mxu0 %v604
        %1485 = vmatpush1.msra.mxu0 %v603
        %1486 = vmatprep.subr.mxu0 %v600
        %1487 = vmatpush1.msra.mxu0 %v599
        %1488 = vmatprep.subr.mxu0 %v596
        %1489 = vmatpush1.msra.mxu0 %v595
        %1490 = vmatprep.subr.mxu0 0.0
        %1491 = vmatpush2.msra.mxu0 0.0
        %1492 = vmatprep.subr.mxu0 0.0
        %1493 = vmatpush2.msra.mxu0 0.0
        %1494 = vmatprep.subr.mxu0 0.0
        %1495 = vmatpush2.msra.mxu0 0.0
        %1496 = vmatprep.subr.mxu0 0.0
        %1497 = vmatpush2.msra.mxu0 0.0
        %1498 = vmatprep.subr.mxu0 0.0
        %1499 = vmatpush2.msra.mxu0 0.0
        %1500 = vmatprep.subr.mxu0 0.0
        %1501 = vmatpush2.msra.mxu0 0.0
        %1502 = vmatprep.subr.mxu0 0.0
        %1503 = vmatpush2.msra.mxu0 0.0
        %1504 = vmatprep.subr.mxu0 0.0
        %1505 = vmatpush2.msra.mxu0 0.0
        %1506 = vmatprep.subr.mxu0 0.0
        %1507 = vmatpush2.msra.mxu0 0.0
        %1508 = vmatprep.subr.mxu0 0.0
        %1509 = vmatpush2.msra.mxu0 0.0
        %1510 = vmatprep.subr.mxu0 0.0
        %1511 = vmatpush2.msra.mxu0 0.0
        %1512 = vmatprep.subr.mxu0 0.0
        %1513 = vmatpush2.msra.mxu0 0.0
        %1514 = vmatprep.subr.mxu0 0.0
        %1515 = vmatpush2.msra.mxu0 0.0
        %1516 = vmatprep.subr.mxu0 0.0
        %1517 = vmatpush2.msra.mxu0 0.0
        %1518 = vmatprep.subr.mxu0 0.0
        %1519 = vmatpush2.msra.mxu0 0.0
        %1520 = vmatprep.subr.mxu0 0.0
        %1521 = vmatpush2.msra.mxu0 0.0
        %1522 = vmatprep.mubr.f32.mxu0 0.0
        %1523 = vmatmul.mubr.f32.gmra.mxu0 %v1448
        %v1524 = vpop.f32.mrf.mxu0
        %v1525 = vadd.f32 0.0, %v1524
        %v1526 = vpop.f32.mrf.mxu0
        %v1527 = vadd.f32 0.0, %v1526
        %1528 = vdwg.mxu0
        %1529 = vmatprep.subr.mxu0 %v658
        %1530 = vmatpush1.msra.mxu0 %v657
        %1531 = vmatprep.subr.mxu0 %v654
        %1532 = vmatpush1.msra.mxu0 %v653
        %1533 = vmatprep.subr.mxu0 %v650
        %1534 = vmatpush1.msra.mxu0 %v649
        %1535 = vmatprep.subr.mxu0 %v646
        %1536 = vmatpush1.msra.mxu0 %v645
        %1537 = vmatprep.subr.mxu0 %v642
        %1538 = vmatpush1.msra.mxu0 %v641
        %1539 = vmatprep.subr.mxu0 %v638
        %1540 = vmatpush1.msra.mxu0 %v637
        %1541 = vmatprep.subr.mxu0 %v634
        %1542 = vmatpush1.msra.mxu0 %v633
        %1543 = vmatprep.subr.mxu0 %v630
        %1544 = vmatpush1.msra.mxu0 %v629
        %1545 = vmatprep.subr.mxu0 %v626
        %1546 = vmatpush1.msra.mxu0 %v625
        %1547 = vmatprep.subr.mxu0 %v622
        %1548 = vmatpush1.msra.mxu0 %v621
        %1549 = vmatprep.subr.mxu0 %v618
        %1550 = vmatpush1.msra.mxu0 %v617
        %1551 = vmatprep.subr.mxu0 %v614
        %1552 = vmatpush1.msra.mxu0 %v613
        %1553 = vmatprep.subr.mxu0 %v610
        %1554 = vmatpush1.msra.mxu0 %v609
        %1555 = vmatprep.subr.mxu0 %v606
        %1556 = vmatpush1.msra.mxu0 %v605
        %1557 = vmatprep.subr.mxu0 %v602
        %1558 = vmatpush1.msra.mxu0 %v601
        %1559 = vmatprep.subr.mxu0 %v598
        %1560 = vmatpush1.msra.mxu0 %v597
        %1561 = vmatprep.subr.mxu0 0.0
        %1562 = vmatpush2.msra.mxu0 0.0
        %1563 = vmatprep.subr.mxu0 0.0
        %1564 = vmatpush2.msra.mxu0 0.0
        %1565 = vmatprep.subr.mxu0 0.0
        %1566 = vmatpush2.msra.mxu0 0.0
        %1567 = vmatprep.subr.mxu0 0.0
        %1568 = vmatpush2.msra.mxu0 0.0
        %1569 = vmatprep.subr.mxu0 0.0
        %1570 = vmatpush2.msra.mxu0 0.0
        %1571 = vmatprep.subr.mxu0 0.0
        %1572 = vmatpush2.msra.mxu0 0.0
        %1573 = vmatprep.subr.mxu0 0.0
        %1574 = vmatpush2.msra.mxu0 0.0
        %1575 = vmatprep.subr.mxu0 0.0
        %1576 = vmatpush2.msra.mxu0 0.0
        %1577 = vmatprep.subr.mxu0 0.0
        %1578 = vmatpush2.msra.mxu0 0.0
        %1579 = vmatprep.subr.mxu0 0.0
        %1580 = vmatpush2.msra.mxu0 0.0
        %1581 = vmatprep.subr.mxu0 0.0
        %1582 = vmatpush2.msra.mxu0 0.0
        %1583 = vmatprep.subr.mxu0 0.0
        %1584 = vmatpush2.msra.mxu0 0.0
        %1585 = vmatprep.subr.mxu0 0.0
        %1586 = vmatpush2.msra.mxu0 0.0
        %1587 = vmatprep.subr.mxu0 0.0
        %1588 = vmatpush2.msra.mxu0 0.0
        %1589 = vmatprep.subr.mxu0 0.0
        %1590 = vmatpush2.msra.mxu0 0.0
        %1591 = vmatprep.subr.mxu0 0.0
        %1592 = vmatpush2.msra.mxu0 0.0
        %1593 = vmatprep.mubr.f32.mxu0 0.0
        %1594 = vmatmul.mubr.f32.gmra.mxu0 %v1448
        %v1595 = vpop.f32.mrf.mxu0
        %v1596 = vadd.f32 0.0, %v1595
        %v1597 = vpop.f32.mrf.mxu0
        %v1598 = vadd.f32 0.0, %v1597
        %1599 = vdwg.mxu0
        %v1600 = vadd.f32 %v1454, %v1525
        %v1601 = vadd.f32 %v1455, %v1527
        %v1602 = vadd.f32 %v1456, %v1596
        %v1603 = vadd.f32 %v1457, %v1598
        %v1604 = vxor.u32 %v1600, 2147483648
        %v1605 = vmul.f32 %v1604, 1.442695
        %v1606 = vpow.pop %v1605
        %v1607 = vadd.f32 %v1606, 1.0
        %v1608 = vrcp.pop %v1607
        %v1609 = vmul.f32 1.0, %v1608
        %v1610 = vxor.u32 %v1601, 2147483648
        %v1611 = vmul.f32 %v1610, 1.442695
        %v1612 = vpow.pop %v1611
        %v1613 = vadd.f32 %v1612, 1.0
        %v1614 = vrcp.pop %v1613
        %v1615 = vmul.f32 1.0, %v1614
        %v1616 = vtanh.pop %v1602
        %v1617 = vxor.u32 %v1603, 2147483648
        %v1618 = vmul.f32 %v1617, 1.442695
        %v1619 = vpow.pop %v1618
        %v1620 = vadd.f32 %v1619, 1.0
        %v1621 = vrcp.pop %v1620
        %v1622 = vmul.f32 1.0, %v1621
        %v1623 = vmul.f32 %v1615, %v1452
        %v1624 = vmul.f32 %v1609, %v1616
        %v1625 = vadd.f32 %v1623, %v1624
        %v1626 = vtanh.pop %v1625
        %v1627 = vmul.f32 %v1622, %v1626
        %v1628 = vstv %s1453
        %vm1629 = vcmp.lt.s32.totalorder %v1628, %v367
        %v1630 = vsel %vm1629, 1, 0
        %1631 = vset.pattern.permute.xlu0 0
        %1632 = vperm.xlu0 %1631, %v1630
        %v1633 = vpop.permute.xlu0 %1632
        %vm1634 = vcmp.eq.s32.totalorder %v1633, 1
        %v1635 = vsel %vm1634, %v1627, %v1448
        %v1636 = vsel %vm1634, %v1625, %v1452
        %s1637 = scalar_select %p589, 5, 2
        %v1638 = vld [vmem:[#allocation2 + $0x20] sm:$0xc]
        %v1639 = vld [vmem:[#allocation2 + $0x28] sm:$0xc]
        %v1640 = vld [vmem:[#allocation2 + $0x30] sm:$0xc]
        %v1641 = vld [vmem:[#allocation2 + $0x38] sm:$0xc]
        %1642 = vmatprep.subr.mxu0 %v656
        %1643 = vmatpush1.msra.mxu0 %v655
        %1644 = vmatprep.subr.mxu0 %v652
        %1645 = vmatpush1.msra.mxu0 %v651
        %1646 = vmatprep.subr.mxu0 %v648
        %1647 = vmatpush1.msra.mxu0 %v647
        %1648 = vmatprep.subr.mxu0 %v644
        %1649 = vmatpush1.msra.mxu0 %v643
        %1650 = vmatprep.subr.mxu0 %v640
        %1651 = vmatpush1.msra.mxu0 %v639
        %1652 = vmatprep.subr.mxu0 %v636
        %1653 = vmatpush1.msra.mxu0 %v635
        %1654 = vmatprep.subr.mxu0 %v632
        %1655 = vmatpush1.msra.mxu0 %v631
        %1656 = vmatprep.subr.mxu0 %v628
        %1657 = vmatpush1.msra.mxu0 %v627
        %1658 = vmatprep.subr.mxu0 %v624
        %1659 = vmatpush1.msra.mxu0 %v623
        %1660 = vmatprep.subr.mxu0 %v620
        %1661 = vmatpush1.msra.mxu0 %v619
        %1662 = vmatprep.subr.mxu0 %v616
        %1663 = vmatpush1.msra.mxu0 %v615
        %1664 = vmatprep.subr.mxu0 %v612
        %1665 = vmatpush1.msra.mxu0 %v611
        %1666 = vmatprep.subr.mxu0 %v608
        %1667 = vmatpush1.msra.mxu0 %v607
        %1668 = vmatprep.subr.mxu0 %v604
        %1669 = vmatpush1.msra.mxu0 %v603
        %1670 = vmatprep.subr.mxu0 %v600
        %1671 = vmatpush1.msra.mxu0 %v599
        %1672 = vmatprep.subr.mxu0 %v596
        %1673 = vmatpush1.msra.mxu0 %v595
        %1674 = vmatprep.subr.mxu0 0.0
        %1675 = vmatpush2.msra.mxu0 0.0
        %1676 = vmatprep.subr.mxu0 0.0
        %1677 = vmatpush2.msra.mxu0 0.0
        %1678 = vmatprep.subr.mxu0 0.0
        %1679 = vmatpush2.msra.mxu0 0.0
        %1680 = vmatprep.subr.mxu0 0.0
        %1681 = vmatpush2.msra.mxu0 0.0
        %1682 = vmatprep.subr.mxu0 0.0
        %1683 = vmatpush2.msra.mxu0 0.0
        %1684 = vmatprep.subr.mxu0 0.0
        %1685 = vmatpush2.msra.mxu0 0.0
        %1686 = vmatprep.subr.mxu0 0.0
        %1687 = vmatpush2.msra.mxu0 0.0
        %1688 = vmatprep.subr.mxu0 0.0
        %1689 = vmatpush2.msra.mxu0 0.0
        %1690 = vmatprep.subr.mxu0 0.0
        %1691 = vmatpush2.msra.mxu0 0.0
        %1692 = vmatprep.subr.mxu0 0.0
        %1693 = vmatpush2.msra.mxu0 0.0
        %1694 = vmatprep.subr.mxu0 0.0
        %1695 = vmatpush2.msra.mxu0 0.0
        %1696 = vmatprep.subr.mxu0 0.0
        %1697 = vmatpush2.msra.mxu0 0.0
        %1698 = vmatprep.subr.mxu0 0.0
        %1699 = vmatpush2.msra.mxu0 0.0
        %1700 = vmatprep.subr.mxu0 0.0
        %1701 = vmatpush2.msra.mxu0 0.0
        %1702 = vmatprep.subr.mxu0 0.0
        %1703 = vmatpush2.msra.mxu0 0.0
        %1704 = vmatprep.subr.mxu0 0.0
        %1705 = vmatpush2.msra.mxu0 0.0
        %1706 = vmatprep.mubr.f32.mxu0 0.0
        %1707 = vmatmul.mubr.f32.gmra.mxu0 %v1635
        %v1708 = vpop.f32.mrf.mxu0
        %v1709 = vadd.f32 0.0, %v1708
        %v1710 = vpop.f32.mrf.mxu0
        %v1711 = vadd.f32 0.0, %v1710
        %1712 = vdwg.mxu0
        %1713 = vmatprep.subr.mxu0 %v658
        %1714 = vmatpush1.msra.mxu0 %v657
        %1715 = vmatprep.subr.mxu0 %v654
        %1716 = vmatpush1.msra.mxu0 %v653
        %1717 = vmatprep.subr.mxu0 %v650
        %1718 = vmatpush1.msra.mxu0 %v649
        %1719 = vmatprep.subr.mxu0 %v646
        %1720 = vmatpush1.msra.mxu0 %v645
        %1721 = vmatprep.subr.mxu0 %v642
        %1722 = vmatpush1.msra.mxu0 %v641
        %1723 = vmatprep.subr.mxu0 %v638
        %1724 = vmatpush1.msra.mxu0 %v637
        %1725 = vmatprep.subr.mxu0 %v634
        %1726 = vmatpush1.msra.mxu0 %v633
        %1727 = vmatprep.subr.mxu0 %v630
        %1728 = vmatpush1.msra.mxu0 %v629
        %1729 = vmatprep.subr.mxu0 %v626
        %1730 = vmatpush1.msra.mxu0 %v625
        %1731 = vmatprep.subr.mxu0 %v622
        %1732 = vmatpush1.msra.mxu0 %v621
        %1733 = vmatprep.subr.mxu0 %v618
        %1734 = vmatpush1.msra.mxu0 %v617
        %1735 = vmatprep.subr.mxu0 %v614
        %1736 = vmatpush1.msra.mxu0 %v613
        %1737 = vmatprep.subr.mxu0 %v610
        %1738 = vmatpush1.msra.mxu0 %v609
        %1739 = vmatprep.subr.mxu0 %v606
        %1740 = vmatpush1.msra.mxu0 %v605
        %1741 = vmatprep.subr.mxu0 %v602
        %1742 = vmatpush1.msra.mxu0 %v601
        %1743 = vmatprep.subr.mxu0 %v598
        %1744 = vmatpush1.msra.mxu0 %v597
        %1745 = vmatprep.subr.mxu0 0.0
        %1746 = vmatpush2.msra.mxu0 0.0
        %1747 = vmatprep.subr.mxu0 0.0
        %1748 = vmatpush2.msra.mxu0 0.0
        %1749 = vmatprep.subr.mxu0 0.0
        %1750 = vmatpush2.msra.mxu0 0.0
        %1751 = vmatprep.subr.mxu0 0.0
        %1752 = vmatpush2.msra.mxu0 0.0
        %1753 = vmatprep.subr.mxu0 0.0
        %1754 = vmatpush2.msra.mxu0 0.0
        %1755 = vmatprep.subr.mxu0 0.0
        %1756 = vmatpush2.msra.mxu0 0.0
        %1757 = vmatprep.subr.mxu0 0.0
        %1758 = vmatpush2.msra.mxu0 0.0
        %1759 = vmatprep.subr.mxu0 0.0
        %1760 = vmatpush2.msra.mxu0 0.0
        %1761 = vmatprep.subr.mxu0 0.0
        %1762 = vmatpush2.msra.mxu0 0.0
        %1763 = vmatprep.subr.mxu0 0.0
        %1764 = vmatpush2.msra.mxu0 0.0
        %1765 = vmatprep.subr.mxu0 0.0
        %1766 = vmatpush2.msra.mxu0 0.0
        %1767 = vmatprep.subr.mxu0 0.0
        %1768 = vmatpush2.msra.mxu0 0.0
        %1769 = vmatprep.subr.mxu0 0.0
        %1770 = vmatpush2.msra.mxu0 0.0
        %1771 = vmatprep.subr.mxu0 0.0
        %1772 = vmatpush2.msra.mxu0 0.0
        %1773 = vmatprep.subr.mxu0 0.0
        %1774 = vmatpush2.msra.mxu0 0.0
        %1775 = vmatprep.subr.mxu0 0.0
        %1776 = vmatpush2.msra.mxu0 0.0
        %1777 = vmatprep.mubr.f32.mxu0 0.0
        %1778 = vmatmul.mubr.f32.gmra.mxu0 %v1635
        %v1779 = vpop.f32.mrf.mxu0
        %v1780 = vadd.f32 0.0, %v1779
        %v1781 = vpop.f32.mrf.mxu0
        %v1782 = vadd.f32 0.0, %v1781
        %1783 = vdwg.mxu0
        %v1788 = vrot.slane %v1709, 6
        %v1789 = vrot.slane %v1711, 6
        %v1790 = vrot.slane %v1780, 6
        %v1791 = vrot.slane %v1782, 6
        %v1796 = vadd.f32 %v1638, %v1788
        %v1797 = vadd.f32 %v1639, %v1789
        %v1798 = vadd.f32 %v1640, %v1790
        %v1799 = vadd.f32 %v1641, %v1791
        %v1800 = vxor.u32 %v1796, 2147483648
        %v1801 = vmul.f32 %v1800, 1.442695
        %v1802 = vpow.pop %v1801
        %v1803 = vadd.f32 %v1802, 1.0
        %v1804 = vrcp.pop %v1803
        %v1805 = vmul.f32 1.0, %v1804
        %v1806 = vxor.u32 %v1797, 2147483648
        %v1807 = vmul.f32 %v1806, 1.442695
        %v1808 = vpow.pop %v1807
        %v1809 = vadd.f32 %v1808, 1.0
        %v1810 = vrcp.pop %v1809
        %v1811 = vmul.f32 1.0, %v1810
        %v1812 = vtanh.pop %v1798
        %v1813 = vxor.u32 %v1799, 2147483648
        %v1814 = vmul.f32 %v1813, 1.442695
        %v1815 = vpow.pop %v1814
        %v1816 = vadd.f32 %v1815, 1.0
        %v1817 = vrcp.pop %v1816
        %v1818 = vmul.f32 1.0, %v1817
        %v1820 = vrot.slane %v1636, 6
        %v1822 = vmul.f32 %v1811, %v1820
        %v1823 = vmul.f32 %v1805, %v1812
        %v1824 = vadd.f32 %v1822, %v1823
        %v1825 = vtanh.pop %v1824
        %v1826 = vmul.f32 %v1818, %v1825
        %v1827 = vstv %s1637
        %vm1828 = vcmp.lt.s32.totalorder %v1827, %v367
        %v1829 = vsel %vm1828, 1, 0
        %1830 = vset.pattern.permute.xlu0 0
        %1831 = vperm.xlu0 %1830, %v1829
        %v1832 = vpop.permute.xlu0 %1831
        %vm1833 = vcmp.eq.s32.totalorder %v1832, 1
        %v1835 = vrot.slane %v1826, 2
        %v1837 = vsel %vm1833, %v1835, %v1635
        %v1839 = vrot.slane %v1824, 2
        %v1841 = vsel %vm1833, %v1839, %v1636
        %s1842 = scalar_select %p589, 6, 1
        %v1843 = vld [vmem:[#allocation2 + $0x20] sm:$0x30]
        %v1844 = vld [vmem:[#allocation2 + $0x28] sm:$0x30]
        %v1845 = vld [vmem:[#allocation2 + $0x30] sm:$0x30]
        %v1846 = vld [vmem:[#allocation2 + $0x38] sm:$0x30]
        %1847 = vmatprep.subr.mxu0 %v656
        %1848 = vmatpush1.msra.mxu0 %v655
        %1849 = vmatprep.subr.mxu0 %v652
        %1850 = vmatpush1.msra.mxu0 %v651
        %1851 = vmatprep.subr.mxu0 %v648
        %1852 = vmatpush1.msra.mxu0 %v647
        %1853 = vmatprep.subr.mxu0 %v644
        %1854 = vmatpush1.msra.mxu0 %v643
        %1855 = vmatprep.subr.mxu0 %v640
        %1856 = vmatpush1.msra.mxu0 %v639
        %1857 = vmatprep.subr.mxu0 %v636
        %1858 = vmatpush1.msra.mxu0 %v635
        %1859 = vmatprep.subr.mxu0 %v632
        %1860 = vmatpush1.msra.mxu0 %v631
        %1861 = vmatprep.subr.mxu0 %v628
        %1862 = vmatpush1.msra.mxu0 %v627
        %1863 = vmatprep.subr.mxu0 %v624
        %1864 = vmatpush1.msra.mxu0 %v623
        %1865 = vmatprep.subr.mxu0 %v620
        %1866 = vmatpush1.msra.mxu0 %v619
        %1867 = vmatprep.subr.mxu0 %v616
        %1868 = vmatpush1.msra.mxu0 %v615
        %1869 = vmatprep.subr.mxu0 %v612
        %1870 = vmatpush1.msra.mxu0 %v611
        %1871 = vmatprep.subr.mxu0 %v608
        %1872 = vmatpush1.msra.mxu0 %v607
        %1873 = vmatprep.subr.mxu0 %v604
        %1874 = vmatpush1.msra.mxu0 %v603
        %1875 = vmatprep.subr.mxu0 %v600
        %1876 = vmatpush1.msra.mxu0 %v599
        %1877 = vmatprep.subr.mxu0 %v596
        %1878 = vmatpush1.msra.mxu0 %v595
        %1879 = vmatprep.subr.mxu0 0.0
        %1880 = vmatpush2.msra.mxu0 0.0
        %1881 = vmatprep.subr.mxu0 0.0
        %1882 = vmatpush2.msra.mxu0 0.0
        %1883 = vmatprep.subr.mxu0 0.0
        %1884 = vmatpush2.msra.mxu0 0.0
        %1885 = vmatprep.subr.mxu0 0.0
        %1886 = vmatpush2.msra.mxu0 0.0
        %1887 = vmatprep.subr.mxu0 0.0
        %1888 = vmatpush2.msra.mxu0 0.0
        %1889 = vmatprep.subr.mxu0 0.0
        %1890 = vmatpush2.msra.mxu0 0.0
        %1891 = vmatprep.subr.mxu0 0.0
        %1892 = vmatpush2.msra.mxu0 0.0
        %1893 = vmatprep.subr.mxu0 0.0
        %1894 = vmatpush2.msra.mxu0 0.0
        %1895 = vmatprep.subr.mxu0 0.0
        %1896 = vmatpush2.msra.mxu0 0.0
        %1897 = vmatprep.subr.mxu0 0.0
        %1898 = vmatpush2.msra.mxu0 0.0
        %1899 = vmatprep.subr.mxu0 0.0
        %1900 = vmatpush2.msra.mxu0 0.0
        %1901 = vmatprep.subr.mxu0 0.0
        %1902 = vmatpush2.msra.mxu0 0.0
        %1903 = vmatprep.subr.mxu0 0.0
        %1904 = vmatpush2.msra.mxu0 0.0
        %1905 = vmatprep.subr.mxu0 0.0
        %1906 = vmatpush2.msra.mxu0 0.0
        %1907 = vmatprep.subr.mxu0 0.0
        %1908 = vmatpush2.msra.mxu0 0.0
        %1909 = vmatprep.subr.mxu0 0.0
        %1910 = vmatpush2.msra.mxu0 0.0
        %1911 = vmatprep.mubr.f32.mxu0 0.0
        %1912 = vmatmul.mubr.f32.gmra.mxu0 %v1837
        %v1913 = vpop.f32.mrf.mxu0
        %v1914 = vadd.f32 0.0, %v1913
        %v1915 = vpop.f32.mrf.mxu0
        %v1916 = vadd.f32 0.0, %v1915
        %1917 = vdwg.mxu0
        %1918 = vmatprep.subr.mxu0 %v658
        %1919 = vmatpush1.msra.mxu0 %v657
        %1920 = vmatprep.subr.mxu0 %v654
        %1921 = vmatpush1.msra.mxu0 %v653
        %1922 = vmatprep.subr.mxu0 %v650
        %1923 = vmatpush1.msra.mxu0 %v649
        %1924 = vmatprep.subr.mxu0 %v646
        %1925 = vmatpush1.msra.mxu0 %v645
        %1926 = vmatprep.subr.mxu0 %v642
        %1927 = vmatpush1.msra.mxu0 %v641
        %1928 = vmatprep.subr.mxu0 %v638
        %1929 = vmatpush1.msra.mxu0 %v637
        %1930 = vmatprep.subr.mxu0 %v634
        %1931 = vmatpush1.msra.mxu0 %v633
        %1932 = vmatprep.subr.mxu0 %v630
        %1933 = vmatpush1.msra.mxu0 %v629
        %1934 = vmatprep.subr.mxu0 %v626
        %1935 = vmatpush1.msra.mxu0 %v625
        %1936 = vmatprep.subr.mxu0 %v622
        %1937 = vmatpush1.msra.mxu0 %v621
        %1938 = vmatprep.subr.mxu0 %v618
        %1939 = vmatpush1.msra.mxu0 %v617
        %1940 = vmatprep.subr.mxu0 %v614
        %1941 = vmatpush1.msra.mxu0 %v613
        %1942 = vmatprep.subr.mxu0 %v610
        %1943 = vmatpush1.msra.mxu0 %v609
        %1944 = vmatprep.subr.mxu0 %v606
        %1945 = vmatpush1.msra.mxu0 %v605
        %1946 = vmatprep.subr.mxu0 %v602
        %1947 = vmatpush1.msra.mxu0 %v601
        %1948 = vmatprep.subr.mxu0 %v598
        %1949 = vmatpush1.msra.mxu0 %v597
        %1950 = vmatprep.subr.mxu0 0.0
        %1951 = vmatpush2.msra.mxu0 0.0
        %1952 = vmatprep.subr.mxu0 0.0
        %1953 = vmatpush2.msra.mxu0 0.0
        %1954 = vmatprep.subr.mxu0 0.0
        %1955 = vmatpush2.msra.mxu0 0.0
        %1956 = vmatprep.subr.mxu0 0.0
        %1957 = vmatpush2.msra.mxu0 0.0
        %1958 = vmatprep.subr.mxu0 0.0
        %1959 = vmatpush2.msra.mxu0 0.0
        %1960 = vmatprep.subr.mxu0 0.0
        %1961 = vmatpush2.msra.mxu0 0.0
        %1962 = vmatprep.subr.mxu0 0.0
        %1963 = vmatpush2.msra.mxu0 0.0
        %1964 = vmatprep.subr.mxu0 0.0
        %1965 = vmatpush2.msra.mxu0 0.0
        %1966 = vmatprep.subr.mxu0 0.0
        %1967 = vmatpush2.msra.mxu0 0.0
        %1968 = vmatprep.subr.mxu0 0.0
        %1969 = vmatpush2.msra.mxu0 0.0
        %1970 = vmatprep.subr.mxu0 0.0
        %1971 = vmatpush2.msra.mxu0 0.0
        %1972 = vmatprep.subr.mxu0 0.0
        %1973 = vmatpush2.msra.mxu0 0.0
        %1974 = vmatprep.subr.mxu0 0.0
        %1975 = vmatpush2.msra.mxu0 0.0
        %1976 = vmatprep.subr.mxu0 0.0
        %1977 = vmatpush2.msra.mxu0 0.0
        %1978 = vmatprep.subr.mxu0 0.0
        %1979 = vmatpush2.msra.mxu0 0.0
        %1980 = vmatprep.subr.mxu0 0.0
        %1981 = vmatpush2.msra.mxu0 0.0
        %1982 = vmatprep.mubr.f32.mxu0 0.0
        %1983 = vmatmul.mubr.f32.gmra.mxu0 %v1837
        %v1984 = vpop.f32.mrf.mxu0
        %v1985 = vadd.f32 0.0, %v1984
        %v1986 = vpop.f32.mrf.mxu0
        %v1987 = vadd.f32 0.0, %v1986
        %1988 = vdwg.mxu0
        %v1993 = vrot.slane %v1914, 4
        %v1994 = vrot.slane %v1916, 4
        %v1995 = vrot.slane %v1985, 4
        %v1996 = vrot.slane %v1987, 4
        %v2001 = vadd.f32 %v1843, %v1993
        %v2002 = vadd.f32 %v1844, %v1994
        %v2003 = vadd.f32 %v1845, %v1995
        %v2004 = vadd.f32 %v1846, %v1996
        %v2005 = vxor.u32 %v2001, 2147483648
        %v2006 = vmul.f32 %v2005, 1.442695
        %v2007 = vpow.pop %v2006
        %v2008 = vadd.f32 %v2007, 1.0
        %v2009 = vrcp.pop %v2008
        %v2010 = vmul.f32 1.0, %v2009
        %v2011 = vxor.u32 %v2002, 2147483648
        %v2012 = vmul.f32 %v2011, 1.442695
        %v2013 = vpow.pop %v2012
        %v2014 = vadd.f32 %v2013, 1.0
        %v2015 = vrcp.pop %v2014
        %v2016 = vmul.f32 1.0, %v2015
        %v2017 = vtanh.pop %v2003
        %v2018 = vxor.u32 %v2004, 2147483648
        %v2019 = vmul.f32 %v2018, 1.442695
        %v2020 = vpow.pop %v2019
        %v2021 = vadd.f32 %v2020, 1.0
        %v2022 = vrcp.pop %v2021
        %v2023 = vmul.f32 1.0, %v2022
        %v2025 = vrot.slane %v1841, 4
        %v2027 = vmul.f32 %v2016, %v2025
        %v2028 = vmul.f32 %v2010, %v2017
        %v2029 = vadd.f32 %v2027, %v2028
        %v2030 = vtanh.pop %v2029
        %v2031 = vmul.f32 %v2023, %v2030
        %v2032 = vstv %s1842
        %vm2033 = vcmp.lt.s32.totalorder %v2032, %v367
        %v2034 = vsel %vm2033, 1, 0
        %2035 = vset.pattern.permute.xlu0 0
        %2036 = vperm.xlu0 %2035, %v2034
        %v2037 = vpop.permute.xlu0 %2036
        %vm2038 = vcmp.eq.s32.totalorder %v2037, 1
        %v2040 = vrot.slane %v2031, 4
        %v2042 = vsel %vm2038, %v2040, %v1837
        %v2044 = vrot.slane %v2029, 4
        %v2046 = vsel %vm2038, %v2044, %v1841
        %s2047 = scalar_select %p589, 7, 0
        %v2048 = vld [vmem:[#allocation2 + $0x20] sm:$0xc0]
        %v2049 = vld [vmem:[#allocation2 + $0x28] sm:$0xc0]
        %v2050 = vld [vmem:[#allocation2 + $0x30] sm:$0xc0]
        %v2051 = vld [vmem:[#allocation2 + $0x38] sm:$0xc0]
        %2052 = vmatprep.subr.mxu0 %v656
        %2053 = vmatpush1.msra.mxu0 %v655
        %2054 = vmatprep.subr.mxu0 %v652
        %2055 = vmatpush1.msra.mxu0 %v651
        %2056 = vmatprep.subr.mxu0 %v648
        %2057 = vmatpush1.msra.mxu0 %v647
        %2058 = vmatprep.subr.mxu0 %v644
        %2059 = vmatpush1.msra.mxu0 %v643
        %2060 = vmatprep.subr.mxu0 %v640
        %2061 = vmatpush1.msra.mxu0 %v639
        %2062 = vmatprep.subr.mxu0 %v636
        %2063 = vmatpush1.msra.mxu0 %v635
        %2064 = vmatprep.subr.mxu0 %v632
        %2065 = vmatpush1.msra.mxu0 %v631
        %2066 = vmatprep.subr.mxu0 %v628
        %2067 = vmatpush1.msra.mxu0 %v627
        %2068 = vmatprep.subr.mxu0 %v624
        %2069 = vmatpush1.msra.mxu0 %v623
        %2070 = vmatprep.subr.mxu0 %v620
        %2071 = vmatpush1.msra.mxu0 %v619
        %2072 = vmatprep.subr.mxu0 %v616
        %2073 = vmatpush1.msra.mxu0 %v615
        %2074 = vmatprep.subr.mxu0 %v612
        %2075 = vmatpush1.msra.mxu0 %v611
        %2076 = vmatprep.subr.mxu0 %v608
        %2077 = vmatpush1.msra.mxu0 %v607
        %2078 = vmatprep.subr.mxu0 %v604
        %2079 = vmatpush1.msra.mxu0 %v603
        %2080 = vmatprep.subr.mxu0 %v600
        %2081 = vmatpush1.msra.mxu0 %v599
        %2082 = vmatprep.subr.mxu0 %v596
        %2083 = vmatpush1.msra.mxu0 %v595
        %2084 = vmatprep.subr.mxu0 0.0
        %2085 = vmatpush2.msra.mxu0 0.0
        %2086 = vmatprep.subr.mxu0 0.0
        %2087 = vmatpush2.msra.mxu0 0.0
        %2088 = vmatprep.subr.mxu0 0.0
        %2089 = vmatpush2.msra.mxu0 0.0
        %2090 = vmatprep.subr.mxu0 0.0
        %2091 = vmatpush2.msra.mxu0 0.0
        %2092 = vmatprep.subr.mxu0 0.0
        %2093 = vmatpush2.msra.mxu0 0.0
        %2094 = vmatprep.subr.mxu0 0.0
        %2095 = vmatpush2.msra.mxu0 0.0
        %2096 = vmatprep.subr.mxu0 0.0
        %2097 = vmatpush2.msra.mxu0 0.0
        %2098 = vmatprep.subr.mxu0 0.0
        %2099 = vmatpush2.msra.mxu0 0.0
        %2100 = vmatprep.subr.mxu0 0.0
        %2101 = vmatpush2.msra.mxu0 0.0
        %2102 = vmatprep.subr.mxu0 0.0
        %2103 = vmatpush2.msra.mxu0 0.0
        %2104 = vmatprep.subr.mxu0 0.0
        %2105 = vmatpush2.msra.mxu0 0.0
        %2106 = vmatprep.subr.mxu0 0.0
        %2107 = vmatpush2.msra.mxu0 0.0
        %2108 = vmatprep.subr.mxu0 0.0
        %2109 = vmatpush2.msra.mxu0 0.0
        %2110 = vmatprep.subr.mxu0 0.0
        %2111 = vmatpush2.msra.mxu0 0.0
        %2112 = vmatprep.subr.mxu0 0.0
        %2113 = vmatpush2.msra.mxu0 0.0
        %2114 = vmatprep.subr.mxu0 0.0
        %2115 = vmatpush2.msra.mxu0 0.0
        %2116 = vmatprep.mubr.f32.mxu0 0.0
        %2117 = vmatmul.mubr.f32.gmra.mxu0 %v2042
        %v2118 = vpop.f32.mrf.mxu0
        %v2119 = vadd.f32 0.0, %v2118
        %v2120 = vpop.f32.mrf.mxu0
        %v2121 = vadd.f32 0.0, %v2120
        %2122 = vdwg.mxu0
        %2123 = vmatprep.subr.mxu0 %v658
        %2124 = vmatpush1.msra.mxu0 %v657
        %2125 = vmatprep.subr.mxu0 %v654
        %2126 = vmatpush1.msra.mxu0 %v653
        %2127 = vmatprep.subr.mxu0 %v650
        %2128 = vmatpush1.msra.mxu0 %v649
        %2129 = vmatprep.subr.mxu0 %v646
        %2130 = vmatpush1.msra.mxu0 %v645
        %2131 = vmatprep.subr.mxu0 %v642
        %2132 = vmatpush1.msra.mxu0 %v641
        %2133 = vmatprep.subr.mxu0 %v638
        %2134 = vmatpush1.msra.mxu0 %v637
        %2135 = vmatprep.subr.mxu0 %v634
        %2136 = vmatpush1.msra.mxu0 %v633
        %2137 = vmatprep.subr.mxu0 %v630
        %2138 = vmatpush1.msra.mxu0 %v629
        %2139 = vmatprep.subr.mxu0 %v626
        %2140 = vmatpush1.msra.mxu0 %v625
        %2141 = vmatprep.subr.mxu0 %v622
        %2142 = vmatpush1.msra.mxu0 %v621
        %2143 = vmatprep.subr.mxu0 %v618
        %2144 = vmatpush1.msra.mxu0 %v617
        %2145 = vmatprep.subr.mxu0 %v614
        %2146 = vmatpush1.msra.mxu0 %v613
        %2147 = vmatprep.subr.mxu0 %v610
        %2148 = vmatpush1.msra.mxu0 %v609
        %2149 = vmatprep.subr.mxu0 %v606
        %2150 = vmatpush1.msra.mxu0 %v605
        %2151 = vmatprep.subr.mxu0 %v602
        %2152 = vmatpush1.msra.mxu0 %v601
        %2153 = vmatprep.subr.mxu0 %v598
        %2154 = vmatpush1.msra.mxu0 %v597
        %2155 = vmatprep.subr.mxu0 0.0
        %2156 = vmatpush2.msra.mxu0 0.0
        %2157 = vmatprep.subr.mxu0 0.0
        %2158 = vmatpush2.msra.mxu0 0.0
        %2159 = vmatprep.subr.mxu0 0.0
        %2160 = vmatpush2.msra.mxu0 0.0
        %2161 = vmatprep.subr.mxu0 0.0
        %2162 = vmatpush2.msra.mxu0 0.0
        %2163 = vmatprep.subr.mxu0 0.0
        %2164 = vmatpush2.msra.mxu0 0.0
        %2165 = vmatprep.subr.mxu0 0.0
        %2166 = vmatpush2.msra.mxu0 0.0
        %2167 = vmatprep.subr.mxu0 0.0
        %2168 = vmatpush2.msra.mxu0 0.0
        %2169 = vmatprep.subr.mxu0 0.0
        %2170 = vmatpush2.msra.mxu0 0.0
        %2171 = vmatprep.subr.mxu0 0.0
        %2172 = vmatpush2.msra.mxu0 0.0
        %2173 = vmatprep.subr.mxu0 0.0
        %2174 = vmatpush2.msra.mxu0 0.0
        %2175 = vmatprep.subr.mxu0 0.0
        %2176 = vmatpush2.msra.mxu0 0.0
        %2177 = vmatprep.subr.mxu0 0.0
        %2178 = vmatpush2.msra.mxu0 0.0
        %2179 = vmatprep.subr.mxu0 0.0
        %2180 = vmatpush2.msra.mxu0 0.0
        %2181 = vmatprep.subr.mxu0 0.0
        %2182 = vmatpush2.msra.mxu0 0.0
        %2183 = vmatprep.subr.mxu0 0.0
        %2184 = vmatpush2.msra.mxu0 0.0
        %2185 = vmatprep.subr.mxu0 0.0
        %2186 = vmatpush2.msra.mxu0 0.0
        %2187 = vmatprep.mubr.f32.mxu0 0.0
        %2188 = vmatmul.mubr.f32.gmra.mxu0 %v2042
        %v2189 = vpop.f32.mrf.mxu0
        %v2190 = vadd.f32 0.0, %v2189
        %v2191 = vpop.f32.mrf.mxu0
        %v2192 = vadd.f32 0.0, %v2191
        %2193 = vdwg.mxu0
        %v2198 = vrot.slane %v2119, 2
        %v2199 = vrot.slane %v2121, 2
        %v2200 = vrot.slane %v2190, 2
        %v2201 = vrot.slane %v2192, 2
        %v2206 = vadd.f32 %v2048, %v2198
        %v2207 = vadd.f32 %v2049, %v2199
        %v2208 = vadd.f32 %v2050, %v2200
        %v2209 = vadd.f32 %v2051, %v2201
        %v2210 = vxor.u32 %v2206, 2147483648
        %v2211 = vmul.f32 %v2210, 1.442695
        %v2212 = vpow.pop %v2211
        %v2213 = vadd.f32 %v2212, 1.0
        %v2214 = vrcp.pop %v2213
        %v2215 = vmul.f32 1.0, %v2214
        %v2216 = vxor.u32 %v2207, 2147483648
        %v2217 = vmul.f32 %v2216, 1.442695
        %v2218 = vpow.pop %v2217
        %v2219 = vadd.f32 %v2218, 1.0
        %v2220 = vrcp.pop %v2219
        %v2221 = vmul.f32 1.0, %v2220
        %v2222 = vtanh.pop %v2208
        %v2223 = vxor.u32 %v2209, 2147483648
        %v2224 = vmul.f32 %v2223, 1.442695
        %v2225 = vpow.pop %v2224
        %v2226 = vadd.f32 %v2225, 1.0
        %v2227 = vrcp.pop %v2226
        %v2228 = vmul.f32 1.0, %v2227
        %v2230 = vrot.slane %v2046, 2
        %v2232 = vmul.f32 %v2221, %v2230
        %v2233 = vmul.f32 %v2215, %v2222
        %v2234 = vadd.f32 %v2232, %v2233
        %v2235 = vtanh.pop %v2234
        %v2236 = vmul.f32 %v2228, %v2235
        %v2237 = vstv %s2047
        %vm2238 = vcmp.lt.s32.totalorder %v2237, %v367
        %v2239 = vsel %vm2238, 1, 0
        %2240 = vset.pattern.permute.xlu0 0
        %2241 = vperm.xlu0 %2240, %v2239
        %v2242 = vpop.permute.xlu0 %2241
        %vm2243 = vcmp.eq.s32.totalorder %v2242, 1
        %v2245 = vrot.slane %v2236, 6
        %v2247 = vsel %vm2243, %v2245, %v2042
        %v2248 = vld [vmem:[%s366] sm:$0xff]
        %v2249 = vld [vmem:[%s366 + $0x8] sm:$0xff]
        %v2250 = vld [vmem:[%s366 + $0x10] sm:$0xff]
        %v2251 = vld [vmem:[%s366 + $0x18] sm:$0xff]
        %v2252 = vld [vmem:[%s366 + $0x20] sm:$0xff]
        %v2253 = vld [vmem:[%s366 + $0x28] sm:$0xff]
        %v2254 = vld [vmem:[%s366 + $0x30] sm:$0xff]
        %v2255 = vld [vmem:[%s366 + $0x38] sm:$0xff]
        %v2256 = vld [vmem:[%s366 + $0x40] sm:$0xff]
        %v2257 = vld [vmem:[%s366 + $0x48] sm:$0xff]
        %v2258 = vld [vmem:[%s366 + $0x50] sm:$0xff]
        %v2259 = vld [vmem:[%s366 + $0x58] sm:$0xff]
        %v2260 = vld [vmem:[%s366 + $0x60] sm:$0xff]
        %v2261 = vld [vmem:[%s366 + $0x68] sm:$0xff]
        %v2262 = vld [vmem:[%s366 + $0x70] sm:$0xff]
        %v2263 = vld [vmem:[%s366 + $0x78] sm:$0xff]
        %2264 = vmatprep.subr.mxu0 0.0
        %2265 = vmatpush1.msra.mxu0 %v2263
        %2266 = vmatprep.subr.mxu0 0.0
        %2267 = vmatpush1.msra.mxu0 %v2262
        %2268 = vmatprep.subr.mxu0 0.0
        %2269 = vmatpush1.msra.mxu0 %v2261
        %2270 = vmatprep.subr.mxu0 0.0
        %2271 = vmatpush1.msra.mxu0 %v2260
        %2272 = vmatprep.subr.mxu0 0.0
        %2273 = vmatpush1.msra.mxu0 %v2259
        %2274 = vmatprep.subr.mxu0 0.0
        %2275 = vmatpush1.msra.mxu0 %v2258
        %2276 = vmatprep.subr.mxu0 0.0
        %2277 = vmatpush1.msra.mxu0 %v2257
        %2278 = vmatprep.subr.mxu0 0.0
        %2279 = vmatpush1.msra.mxu0 %v2256
        %2280 = vmatprep.subr.mxu0 0.0
        %2281 = vmatpush1.msra.mxu0 %v2255
        %2282 = vmatprep.subr.mxu0 0.0
        %2283 = vmatpush1.msra.mxu0 %v2254
        %2284 = vmatprep.subr.mxu0 0.0
        %2285 = vmatpush1.msra.mxu0 %v2253
        %2286 = vmatprep.subr.mxu0 0.0
        %2287 = vmatpush1.msra.mxu0 %v2252
        %2288 = vmatprep.subr.mxu0 0.0
        %2289 = vmatpush1.msra.mxu0 %v2251
        %2290 = vmatprep.subr.mxu0 0.0
        %2291 = vmatpush1.msra.mxu0 %v2250
        %2292 = vmatprep.subr.mxu0 0.0
        %2293 = vmatpush1.msra.mxu0 %v2249
        %2294 = vmatprep.subr.mxu0 0.0
        %2295 = vmatpush1.msra.mxu0 %v2248
        %2296 = vmatprep.subr.mxu0 0.0
        %2297 = vmatpush2.msra.mxu0 0.0
        %2298 = vmatprep.subr.mxu0 0.0
        %2299 = vmatpush2.msra.mxu0 0.0
        %2300 = vmatprep.subr.mxu0 0.0
        %2301 = vmatpush2.msra.mxu0 0.0
        %2302 = vmatprep.subr.mxu0 0.0
        %2303 = vmatpush2.msra.mxu0 0.0
        %2304 = vmatprep.subr.mxu0 0.0
        %2305 = vmatpush2.msra.mxu0 0.0
        %2306 = vmatprep.subr.mxu0 0.0
        %2307 = vmatpush2.msra.mxu0 0.0
        %2308 = vmatprep.subr.mxu0 0.0
        %2309 = vmatpush2.msra.mxu0 0.0
        %2310 = vmatprep.subr.mxu0 0.0
        %2311 = vmatpush2.msra.mxu0 0.0
        %2312 = vmatprep.subr.mxu0 0.0
        %2313 = vmatpush2.msra.mxu0 0.0
        %2314 = vmatprep.subr.mxu0 0.0
        %2315 = vmatpush2.msra.mxu0 0.0
        %2316 = vmatprep.subr.mxu0 0.0
        %2317 = vmatpush2.msra.mxu0 0.0
        %2318 = vmatprep.subr.mxu0 0.0
        %2319 = vmatpush2.msra.mxu0 0.0
        %2320 = vmatprep.subr.mxu0 0.0
        %2321 = vmatpush2.msra.mxu0 0.0
        %2322 = vmatprep.subr.mxu0 0.0
        %2323 = vmatpush2.msra.mxu0 0.0
        %2324 = vmatprep.subr.mxu0 0.0
        %2325 = vmatpush2.msra.mxu0 0.0
        %2326 = vmatprep.subr.mxu0 0.0
        %2327 = vmatpush2.msra.mxu0 0.0
        %2328 = vmatprep.mubr.f32.mxu0 0.0
        %2329 = vmatmul.mubr.f32.gmra.mxu0 %v2247
        %v2330 = vpop.f32.mrf.mxu0
        %v2331 = vadd.f32 0.0, %v2330
        %v2332 = vpop.f32.mrf.mxu0
        %2333 = vdwg.mxu0
        %vm2334 = vcmask 33792
        %2335 = vst.msk [vmem:[%s352] sm:$0x3] %vm2334, %v2331
        %s2336 = sand.u32 %s185, 1
        %s2337 = scalar_lea.sflag [#allocation5], %s2336
        %s2338 = sand.u32 %s185, 1
        %s2339 = smul.addr %s2338, 2
        %s2340 = scalar_lea.vmem [#allocation8], %s2339
        // Predicated region
        $region53: #{tpu_custom_call.1} parent=43 // pred_check
          %p2341 = pneg %p195
        $region54: #{tpu_custom_call.1} parent=43 // pred_check_branch
          %2343 = sbr.rel (%p2341) target = $region56
        $region55: #{tpu_custom_call.1} parent=43 // pred_region
          %s2345 = ssub.s32 32, 32
          %2346 = vsyncadd %s2337, %s2345
          %s2347 = smul.addr %s26, 32
          %s2348 = scalar_lea.hbm %s6, %s2347
          %s2350 = sshll.u32 %s2340, 4
          %s2351 = int_to_ptr.vmem [resolvable:$true] %s2350
          %2353 = dma.vmem_to_hbm [thread:$0]  %s2351, 32, %s2348, %s2337
        $region56: #{tpu_custom_call.1} parent=43 // pred_fallthru
          _
      $region44: #{tpu_custom_call.1} parent=5 // pred_fallthru
        _
      %p2354 = scmp.le.s32.totalorder 2, %s21
      // Predicated region
      $region57: #{tpu_custom_call.1} parent=5 // pred_check
        %p2355 = pneg %p2354
      $region58: #{tpu_custom_call.1} parent=5 // pred_check_branch
        %2357 = sbr.rel (%p2355) target = $region60
      $region59: #{tpu_custom_call.1} parent=5 // pred_region
        %s2358 = ssub.s32 %s21, 2
        // Predicated region
        $region61: #{tpu_custom_call.1} parent=59 // pred_check
          %p2359 = pneg %p201
        $region62: #{tpu_custom_call.1} parent=59 // pred_check_branch
          %2361 = sbr.rel (%p2359) target = $region64
        $region63: #{tpu_custom_call.1} parent=59 // pred_region
          %s2362 = sand.u32 %s186, 1
          %s2363 = scalar_lea.sflag [#allocation5], %s2362
          %s2364 = sand.u32 %s186, 1
          %s2365 = smul.addr %s2364, 2
          %s2366 = scalar_lea.vmem [#allocation8], %s2365
          %2367 = dma.done %s2363, 32
        $region64: #{tpu_custom_call.1} parent=59 // pred_fallthru
          _
      $region60: #{tpu_custom_call.1} parent=5 // pred_fallthru
        _
    $region6: #{tpu_custom_call.1} parent=1 // loop_footer
      %s25 = sadd.s32 1, %s21
    $region7: #{tpu_custom_call.1} parent=1 // loop_footer_branch
      %20 = sbr.rel target = $region3
    $region8: #{tpu_custom_call.1} parent=1 // loop_exit
      _
    %2368 = vsyncpa [#allocation4], 1
    %s2369 = scalar_lea.sflag [#allocation4], 1
    %2370 = vsyncpa %s2369, 1
    %2371 = vsyncpa [#allocation7], 1
    %s2372 = scalar_lea.sflag [#allocation7], 1
    %2373 = vsyncpa %s2372, 1
    %2374 = vsyncpa [#allocation5], 1
    %s2375 = scalar_lea.sflag [#allocation5], 1
    %2376 = vsyncpa %s2375, 1

</llo_original>
